<compile_context>
chip_gen: v5e
topology: v5e:2x2
jax: 0.10.0
libtpu: 0.0.40
codegen_flags: <defaults>
</compile_context>

<pallas_src>
import jax
import jax.numpy as jnp
import numpy as np
from jax.experimental import pallas as pl
from jax.experimental.pallas import tpu as pltpu

LAYER = 2  # matches the module


def lstm_kernel(x_ref, h0_ref, c0_ref, wih0_ref, wrec_ref, b_ref,
                wl1_ref, bl1_ref, wl2_ref, bl2_ref, out_ref, xg_ref):
    B = h0_ref.shape[1]
    H = h0_ref.shape[2]
    T = x_ref.shape[0] // B

    # Weight slabs arrive pre-cast to bf16 from the wrapper (no in-kernel pack).
    wih0 = wih0_ref[...]                                  # (D, 4H)  bf16
    whh0 = wrec_ref[0:H, :]                               # (H, 4H)  bf16
    wih1 = wrec_ref[H:2 * H, :]                           # (H, 4H)  bf16
    whh1 = wrec_ref[2 * H:3 * H, :]                       # (H, 4H)  bf16
    b0 = b_ref[0:1, :]                                    # (1, 4H)  f32 (b_ih + b_hh, layer 0)
    b1 = b_ref[1:2, :]                                    # (1, 4H)  f32 (layer 1)

    # Hoist the layer-0 input projection (and its bias) out of the recurrence:
    # one matmul covering all timesteps, stored to VMEM scratch; the loop then
    # only reads an aligned (B, 4H) slab per step.
    xg_ref[...] = jnp.dot(x_ref[...], wih0,
                          preferred_element_type=jnp.float32) + b0

    def activations(gates):
        # Two vreg-wide EUP passes over the full (B, 4H) tile, then static
        # 32-lane slices. PyTorch gate order: i, f, g, o.
        sg = jax.nn.sigmoid(gates)
        tg = jnp.tanh(gates)
        return sg[:, 0:H], sg[:, H:2 * H], tg[:, 2 * H:3 * H], sg[:, 3 * H:4 * H]

    h_l0, c_l0 = h0_ref[0], c0_ref[0]
    h_l1, c_l1 = h0_ref[1], c0_ref[1]
    # Single bf16 copy of each hidden state, refreshed once per step and reused
    # by every MXU consumer (keeps the pack off the critical path).
    h_l0_bf = h_l0.astype(jnp.bfloat16)
    h_l1_bf = h_l1.astype(jnp.bfloat16)

    # T is small and static -> full unroll (straight-line code). Layer-0 of step
    # t+1 depends only on h_l0(t), and the h_l1 half of layer-1's gates depends
    # only on h_l1(t-1), so the scheduler can overlap them with the serial chain.
    for t in range(T):
        # ---- layer 1, recurrent half: independent of this step's layer 0,
        # issues early and hides under layer-0's cell math.
        g1_rec = jnp.dot(h_l1_bf, whh1, preferred_element_type=jnp.float32) + b1

        # ---- layer 0: only the recurrent dot remains on the critical path
        g0 = xg_ref[t * B:(t + 1) * B, :] + jnp.dot(
            h_l0_bf, whh0, preferred_element_type=jnp.float32)
        i0, f0, gg0, o0 = activations(g0)
        c_l0 = f0 * c_l0 + i0 * gg0
        h_l0 = o0 * jnp.tanh(c_l0)
        h_l0_bf = h_l0.astype(jnp.bfloat16)       # cast once, reused twice

        # ---- layer 1, on-path half: K=H dot only (no concat, no fused K=2H)
        g1 = g1_rec + jnp.dot(h_l0_bf, wih1, preferred_element_type=jnp.float32)
        i1, f1, gg1, o1 = activations(g1)
        c_l1 = f1 * c_l1 + i1 * gg1
        h_l1 = o1 * jnp.tanh(c_l1)
        h_l1_bf = h_l1.astype(jnp.bfloat16)

    # head (runs once, off the recurrent path; kept in f32)
    z = jnp.tanh(jnp.dot(h_l1, wl1_ref[...], preferred_element_type=jnp.float32)
                 + bl1_ref[...])
    out_ref[...] = (jnp.dot(z, wl2_ref[...], preferred_element_type=jnp.float32)
                    + bl2_ref[...])
    # TODO(synk): nn.Dropout(0.5) is defined in __init__ but never used in forward(); omitted.


def lstm_forward(x, h0, c0, params):
    """x: (B, T, D) batch_first like PyTorch. Returns (B, output_size)."""
    (wih0, whh0, b0, wih1, whh1, b1, wl1, bl1, wl2, bl2) = params
    B, T, D = x.shape
    H = whh0.shape[0]
    out_size = wl2.shape[1]

    # time-major flatten once in the wrapper: step t reads rows [t*B, (t+1)*B).
    # x and the big weight slabs are pre-cast to bf16 (half the DMA bytes, no
    # in-kernel pack); biases / head weights / h0 / c0 stay f32.
    x_tm = jnp.transpose(x, (1, 0, 2)).reshape(T * B, D).astype(jnp.bfloat16)
    wih0_bf = wih0.astype(jnp.bfloat16)
    w_rec = jnp.concatenate([whh0, wih1, whh1], axis=0).astype(jnp.bfloat16)  # (3H, 4H)
    b_lstm = jnp.concatenate([b0, b1], axis=0)                                # (2, 4H) f32

    flops = (2 * T * B * D * 4 * H                        # hoisted input projection
             + T * (2 * B * H * 4 * H                     # layer-0 recurrent dot
                    + 2 * B * H * 4 * H                   # layer-1 recurrent-half dot
                    + 2 * B * H * 4 * H)                  # layer-1 on-path dot
             + 2 * B * H * 10 + 2 * B * 10 * out_size)    # head
    transcendentals = T * 2 * (2 * B * 4 * H + B * H) + B * 10
    bytes_accessed = (2 * (x_tm.size + wih0_bf.size + w_rec.size)      # bf16 inputs
                      + 4 * (h0.size + c0.size + b_lstm.size + wl1.size
                             + bl1.size + wl2.size + bl2.size
                             + B * out_size))

    vmem = pl.BlockSpec(memory_space=pltpu.MemorySpace.VMEM)
    return pl.pallas_call(
        lstm_kernel,
        out_shape=jax.ShapeDtypeStruct((B, out_size), jnp.float32),
        in_specs=[vmem] * 10,
        out_specs=vmem,
        scratch_shapes=[pltpu.VMEM((T * B, 4 * H), jnp.float32)],
        cost_estimate=pl.CostEstimate(flops=flops,
                                      transcendentals=transcendentals,
                                      bytes_accessed=bytes_accessed),
    )(x_tm, h0, c0, wih0_bf, w_rec, b_lstm, wl1, bl1, wl2, bl2)


def lstm_reference(x, h0, c0, params):
    """Pure-JAX (f32) reference mirroring torch.nn.LSTM semantics."""
    (wih0, whh0, b0, wih1, whh1, b1, wl1, bl1, wl2, bl2) = params
    B, T, D = x.shape
    H = whh0.shape[0]
    h_l0, c_l0, h_l1, c_l1 = h0[0], c0[0], h0[1], c0[1]

    def cell(xt, h, c, wih, whh, b):
        g = xt @ wih + h @ whh + b
        i = jax.nn.sigmoid(g[:, :H])
        f = jax.nn.sigmoid(g[:, H:2 * H])
        gg = jnp.tanh(g[:, 2 * H:3 * H])
        o = jax.nn.sigmoid(g[:, 3 * H:])
        c = f * c + i * gg
        return o * jnp.tanh(c), c

    for t in range(T):
        h_l0, c_l0 = cell(x[:, t], h_l0, c_l0, wih0, whh0, b0)
        h_l1, c_l1 = cell(h_l0, h_l1, c_l1, wih1, whh1, b1)
    z = jnp.tanh(h_l1 @ wl1 + bl1)
    return z @ wl2 + bl2


def init_params(key, input_size, hidden_size, output_size):
    """Deterministic init (PyTorch-style U(-1/sqrt(H), 1/sqrt(H)) for LSTM/Linear)."""
    H = hidden_size
    ks = jax.random.split(key, 12)
    s = 1.0 / np.sqrt(H)

    def u(k, shape, scale):
        return jax.random.uniform(k, shape, jnp.float32, -scale, scale)

    # LSTM layer 0  (weights stored transposed: (in, 4H))
    wih0 = u(ks[0], (input_size, 4 * H), s)
    whh0 = u(ks[1], (H, 4 * H), s)
    b0 = u(ks[2], (1, 4 * H), s) + u(ks[3], (1, 4 * H), s)   # b_ih + b_hh
    # LSTM layer 1 (input is layer-0 hidden, size H)
    wih1 = u(ks[4], (H, 4 * H), s)
    whh1 = u(ks[5], (H, 4 * H), s)
    b1 = u(ks[6], (1, 4 * H), s) + u(ks[7], (1, 4 * H), s)
    # head: Linear(H -> 10), Linear(10 -> output_size)
    s1 = 1.0 / np.sqrt(H)
    wl1 = u(ks[8], (H, 10), s1)
    bl1 = u(ks[9], (1, 10), s1)
    s2 = 1.0 / np.sqrt(10)
    wl2 = u(ks[10], (10, output_size), s2)
    bl2 = u(ks[11], (1, output_size), s2)
    return (wih0, whh0, b0, wih1, whh1, b1, wl1, bl1, wl2, bl2)


if __name__ == "__main__":
    # small shapes: batch=8, seq=8, input_size == hidden_size = 32, output_size = 4
    B, T, D, H, OUT = 8, 8, 32, 32, 4

    key = jax.random.PRNGKey(0)
    k_x, k_h, k_c, k_p = jax.random.split(key, 4)

    x = jax.random.normal(k_x, (B, T, D), jnp.float32)
    h0 = jax.random.normal(k_h, (LAYER, B, H), jnp.float32)   # initHidden()
    c0 = jax.random.normal(k_c, (LAYER, B, H), jnp.float32)
    params = init_params(k_p, D, H, OUT)

    out = jax.block_until_ready(lstm_forward(x, h0, c0, params))
    ref = jax.block_until_ready(lstm_reference(x, h0, c0, params))

    assert out.shape == (B, OUT), out.shape
    # bf16 MXU operands / bf16 x & h (f32 accumulation) in the kernel ->
    # looser tolerance than the pure-f32 reference.
    np.testing.assert_allclose(np.asarray(out), np.asarray(ref), atol=5e-2, rtol=5e-2)
    print("KERNEL_OK")
</pallas_src>

<mosaic_0001>
module attributes {stable_mosaic.version = 11 : i64} {
  func.func @lstm_kernel(%arg0: memref<64x32xbf16, #tpu.memory_space<vmem>>, %arg1: memref<2x8x32xf32, #tpu.memory_space<vmem>>, %arg2: memref<2x8x32xf32, #tpu.memory_space<vmem>>, %arg3: memref<32x128xbf16, #tpu.memory_space<vmem>>, %arg4: memref<96x128xbf16, #tpu.memory_space<vmem>>, %arg5: memref<2x128xf32, #tpu.memory_space<vmem>>, %arg6: memref<32x10xf32, #tpu.memory_space<vmem>>, %arg7: memref<1x10xf32, #tpu.memory_space<vmem>>, %arg8: memref<10x4xf32, #tpu.memory_space<vmem>>, %arg9: memref<1x4xf32, #tpu.memory_space<vmem>>, %arg10: memref<8x4xf32, #tpu.memory_space<vmem>>, %arg11: memref<64x128xf32, #tpu.memory_space<vmem>>) attributes {dimension_semantics = [], scalar_prefetch = 0 : i64, scratch_operands = 1 : i64, tpu.core_type = #tpu.core_type<tc>} {
    %c0 = arith.constant 0 : index
    %c0_0 = arith.constant 0 : index
    %0 = vector.load %arg3[%c0, %c0_0] : memref<32x128xbf16, #tpu.memory_space<vmem>>, vector<32x128xbf16>
    %c0_1 = arith.constant 0 : index
    %c0_2 = arith.constant 0 : index
    %1 = vector.load %arg4[%c0_1, %c0_2] : memref<96x128xbf16, #tpu.memory_space<vmem>>, vector<32x128xbf16>
    %c32 = arith.constant 32 : index
    %c0_3 = arith.constant 0 : index
    %2 = vector.load %arg4[%c32, %c0_3] : memref<96x128xbf16, #tpu.memory_space<vmem>>, vector<32x128xbf16>
    %c64 = arith.constant 64 : index
    %c0_4 = arith.constant 0 : index
    %3 = vector.load %arg4[%c64, %c0_4] : memref<96x128xbf16, #tpu.memory_space<vmem>>, vector<32x128xbf16>
    %c0_5 = arith.constant 0 : index
    %c0_6 = arith.constant 0 : index
    %4 = vector.load %arg5[%c0_5, %c0_6] : memref<2x128xf32, #tpu.memory_space<vmem>>, vector<1x128xf32>
    %c1 = arith.constant 1 : index
    %c0_7 = arith.constant 0 : index
    %5 = vector.load %arg5[%c1, %c0_7] : memref<2x128xf32, #tpu.memory_space<vmem>>, vector<1x128xf32>
    %c0_8 = arith.constant 0 : index
    %c0_9 = arith.constant 0 : index
    %6 = vector.load %arg0[%c0_8, %c0_9] : memref<64x32xbf16, #tpu.memory_space<vmem>>, vector<64x32xbf16>
    %cst = arith.constant dense<0.000000e+00> : vector<64x128xf32>
    %7 = tpu.matmul %6, %0, %cst {dimension_numbers = #tpu.dot_dimension_numbers<[1], [0], [0], [1], [0, 0, 1, 1], [], []>} : vector<64x32xbf16>, vector<32x128xbf16>, vector<64x128xf32> -> vector<64x128xf32>
    %8 = vector.broadcast %4 : vector<1x128xf32> to vector<64x128xf32>
    %9 = arith.addf %7, %8 : vector<64x128xf32>
    %c0_10 = arith.constant 0 : index
    %c0_11 = arith.constant 0 : index
    %10 = vector.load %arg11[%c0_10, %c0_11] : memref<64x128xf32, #tpu.memory_space<vmem>>, vector<64x128xf32>
    tpu.vector_store %arg11[%c0_10, %c0_11], %9 {strides = array<i32>} : memref<64x128xf32, #tpu.memory_space<vmem>>, vector<64x128xf32>,
    %c0_12 = arith.constant 0 : index
    %c0_13 = arith.constant 0 : index
    %c0_14 = arith.constant 0 : index
    %11 = vector.load %arg1[%c0_12, %c0_13, %c0_14] : memref<2x8x32xf32, #tpu.memory_space<vmem>>, vector<1x8x32xf32>
    %12 = vector.shape_cast %11 : vector<1x8x32xf32> to vector<8x32xf32>
    %c0_15 = arith.constant 0 : index
    %c0_16 = arith.constant 0 : index
    %c0_17 = arith.constant 0 : index
    %13 = vector.load %arg2[%c0_15, %c0_16, %c0_17] : memref<2x8x32xf32, #tpu.memory_space<vmem>>, vector<1x8x32xf32>
    %14 = vector.shape_cast %13 : vector<1x8x32xf32> to vector<8x32xf32>
    %c1_18 = arith.constant 1 : index
    %c0_19 = arith.constant 0 : index
    %c0_20 = arith.constant 0 : index
    %15 = vector.load %arg1[%c1_18, %c0_19, %c0_20] : memref<2x8x32xf32, #tpu.memory_space<vmem>>, vector<1x8x32xf32>
    %16 = vector.shape_cast %15 : vector<1x8x32xf32> to vector<8x32xf32>
    %c1_21 = arith.constant 1 : index
    %c0_22 = arith.constant 0 : index
    %c0_23 = arith.constant 0 : index
    %17 = vector.load %arg2[%c1_21, %c0_22, %c0_23] : memref<2x8x32xf32, #tpu.memory_space<vmem>>, vector<1x8x32xf32>
    %18 = vector.shape_cast %17 : vector<1x8x32xf32> to vector<8x32xf32>
    %19 = arith.truncf %12 : vector<8x32xf32> to vector<8x32xbf16>
    %20 = arith.truncf %16 : vector<8x32xf32> to vector<8x32xbf16>
    %cst_24 = arith.constant dense<0.000000e+00> : vector<8x128xf32>
    %21 = tpu.matmul %20, %3, %cst_24 {dimension_numbers = #tpu.dot_dimension_numbers<[1], [0], [0], [1], [0, 0, 1, 1], [], []>} : vector<8x32xbf16>, vector<32x128xbf16>, vector<8x128xf32> -> vector<8x128xf32>
    %22 = vector.broadcast %5 : vector<1x128xf32> to vector<8x128xf32>
    %23 = arith.addf %21, %22 : vector<8x128xf32>
    %c0_25 = arith.constant 0 : index
    %c0_26 = arith.constant 0 : index
    %24 = vector.load %arg11[%c0_25, %c0_26] : memref<64x128xf32, #tpu.memory_space<vmem>>, vector<8x128xf32>
    %cst_27 = arith.constant dense<0.000000e+00> : vector<8x128xf32>
    %25 = tpu.matmul %19, %1, %cst_27 {dimension_numbers = #tpu.dot_dimension_numbers<[1], [0], [0], [1], [0, 0, 1, 1], [], []>} : vector<8x32xbf16>, vector<32x128xbf16>, vector<8x128xf32> -> vector<8x128xf32>
    %26 = arith.addf %24, %25 : vector<8x128xf32>
    %27 = arith.negf %26 : vector<8x128xf32>
    %28 = math.exp %27 : vector<8x128xf32>
    %cst_28 = arith.constant 1.000000e+00 : f32
    %29 = vector.broadcast %cst_28 : f32 to vector<8x128xf32>
    %30 = arith.addf %29, %28 : vector<8x128xf32>
    %31 = arith.divf %29, %30 : vector<8x128xf32>
    %32 = math.tanh %26 : vector<8x128xf32>
    %33 = vector.extract_strided_slice %31 {offsets = [0, 0], sizes = [8, 32], strides = [1, 1]} : vector<8x128xf32> to vector<8x32xf32>
    %34 = vector.extract_strided_slice %31 {offsets = [0, 32], sizes = [8, 32], strides = [1, 1]} : vector<8x128xf32> to vector<8x32xf32>
    %35 = vector.extract_strided_slice %32 {offsets = [0, 64], sizes = [8, 32], strides = [1, 1]} : vector<8x128xf32> to vector<8x32xf32>
    %36 = vector.extract_strided_slice %31 {offsets = [0, 96], sizes = [8, 32], strides = [1, 1]} : vector<8x128xf32> to vector<8x32xf32>
    %37 = arith.mulf %34, %14 : vector<8x32xf32>
    %38 = arith.mulf %33, %35 : vector<8x32xf32>
    %39 = arith.addf %37, %38 : vector<8x32xf32>
    %40 = math.tanh %39 : vector<8x32xf32>
    %41 = arith.mulf %36, %40 : vector<8x32xf32>
    %42 = arith.truncf %41 : vector<8x32xf32> to vector<8x32xbf16>
    %cst_29 = arith.constant dense<0.000000e+00> : vector<8x128xf32>
    %43 = tpu.matmul %42, %2, %cst_29 {dimension_numbers = #tpu.dot_dimension_numbers<[1], [0], [0], [1], [0, 0, 1, 1], [], []>} : vector<8x32xbf16>, vector<32x128xbf16>, vector<8x128xf32> -> vector<8x128xf32>
    %44 = arith.addf %23, %43 : vector<8x128xf32>
    %45 = arith.negf %44 : vector<8x128xf32>
    %46 = math.exp %45 : vector<8x128xf32>
    %cst_30 = arith.constant 1.000000e+00 : f32
    %47 = vector.broadcast %cst_30 : f32 to vector<8x128xf32>
    %48 = arith.addf %47, %46 : vector<8x128xf32>
    %49 = arith.divf %47, %48 : vector<8x128xf32>
    %50 = math.tanh %44 : vector<8x128xf32>
    %51 = vector.extract_strided_slice %49 {offsets = [0, 0], sizes = [8, 32], strides = [1, 1]} : vector<8x128xf32> to vector<8x32xf32>
    %52 = vector.extract_strided_slice %49 {offsets = [0, 32], sizes = [8, 32], strides = [1, 1]} : vector<8x128xf32> to vector<8x32xf32>
    %53 = vector.extract_strided_slice %50 {offsets = [0, 64], sizes = [8, 32], strides = [1, 1]} : vector<8x128xf32> to vector<8x32xf32>
    %54 = vector.extract_strided_slice %49 {offsets = [0, 96], sizes = [8, 32], strides = [1, 1]} : vector<8x128xf32> to vector<8x32xf32>
    %55 = arith.mulf %52, %18 : vector<8x32xf32>
    %56 = arith.mulf %51, %53 : vector<8x32xf32>
    %57 = arith.addf %55, %56 : vector<8x32xf32>
    %58 = math.tanh %57 : vector<8x32xf32>
    %59 = arith.mulf %54, %58 : vector<8x32xf32>
    %60 = arith.truncf %59 : vector<8x32xf32> to vector<8x32xbf16>
    %cst_31 = arith.constant dense<0.000000e+00> : vector<8x128xf32>
    %61 = tpu.matmul %60, %3, %cst_31 {dimension_numbers = #tpu.dot_dimension_numbers<[1], [0], [0], [1], [0, 0, 1, 1], [], []>} : vector<8x32xbf16>, vector<32x128xbf16>, vector<8x128xf32> -> vector<8x128xf32>
    %62 = vector.broadcast %5 : vector<1x128xf32> to vector<8x128xf32>
    %63 = arith.addf %61, %62 : vector<8x128xf32>
    %c8 = arith.constant 8 : index
    %c0_32 = arith.constant 0 : index
    %64 = vector.load %arg11[%c8, %c0_32] : memref<64x128xf32, #tpu.memory_space<vmem>>, vector<8x128xf32>
    %cst_33 = arith.constant dense<0.000000e+00> : vector<8x128xf32>
    %65 = tpu.matmul %42, %1, %cst_33 {dimension_numbers = #tpu.dot_dimension_numbers<[1], [0], [0], [1], [0, 0, 1, 1], [], []>} : vector<8x32xbf16>, vector<32x128xbf16>, vector<8x128xf32> -> vector<8x128xf32>
    %66 = arith.addf %64, %65 : vector<8x128xf32>
    %67 = arith.negf %66 : vector<8x128xf32>
    %68 = math.exp %67 : vector<8x128xf32>
    %cst_34 = arith.constant 1.000000e+00 : f32
    %69 = vector.broadcast %cst_34 : f32 to vector<8x128xf32>
    %70 = arith.addf %69, %68 : vector<8x128xf32>
    %71 = arith.divf %69, %70 : vector<8x128xf32>
    %72 = math.tanh %66 : vector<8x128xf32>
    %73 = vector.extract_strided_slice %71 {offsets = [0, 0], sizes = [8, 32], strides = [1, 1]} : vector<8x128xf32> to vector<8x32xf32>
    %74 = vector.extract_strided_slice %71 {offsets = [0, 32], sizes = [8, 32], strides = [1, 1]} : vector<8x128xf32> to vector<8x32xf32>
    %75 = vector.extract_strided_slice %72 {offsets = [0, 64], sizes = [8, 32], strides = [1, 1]} : vector<8x128xf32> to vector<8x32xf32>
    %76 = vector.extract_strided_slice %71 {offsets = [0, 96], sizes = [8, 32], strides = [1, 1]} : vector<8x128xf32> to vector<8x32xf32>
    %77 = arith.mulf %74, %39 : vector<8x32xf32>
    %78 = arith.mulf %73, %75 : vector<8x32xf32>
    %79 = arith.addf %77, %78 : vector<8x32xf32>
    %80 = math.tanh %79 : vector<8x32xf32>
    %81 = arith.mulf %76, %80 : vector<8x32xf32>
    %82 = arith.truncf %81 : vector<8x32xf32> to vector<8x32xbf16>
    %cst_35 = arith.constant dense<0.000000e+00> : vector<8x128xf32>
    %83 = tpu.matmul %82, %2, %cst_35 {dimension_numbers = #tpu.dot_dimension_numbers<[1], [0], [0], [1], [0, 0, 1, 1], [], []>} : vector<8x32xbf16>, vector<32x128xbf16>, vector<8x128xf32> -> vector<8x128xf32>
    %84 = arith.addf %63, %83 : vector<8x128xf32>
    %85 = arith.negf %84 : vector<8x128xf32>
    %86 = math.exp %85 : vector<8x128xf32>
    %cst_36 = arith.constant 1.000000e+00 : f32
    %87 = vector.broadcast %cst_36 : f32 to vector<8x128xf32>
    %88 = arith.addf %87, %86 : vector<8x128xf32>
    %89 = arith.divf %87, %88 : vector<8x128xf32>
    %90 = math.tanh %84 : vector<8x128xf32>
    %91 = vector.extract_strided_slice %89 {offsets = [0, 0], sizes = [8, 32], strides = [1, 1]} : vector<8x128xf32> to vector<8x32xf32>
    %92 = vector.extract_strided_slice %89 {offsets = [0, 32], sizes = [8, 32], strides = [1, 1]} : vector<8x128xf32> to vector<8x32xf32>
    %93 = vector.extract_strided_slice %90 {offsets = [0, 64], sizes = [8, 32], strides = [1, 1]} : vector<8x128xf32> to vector<8x32xf32>
    %94 = vector.extract_strided_slice %89 {offsets = [0, 96], sizes = [8, 32], strides = [1, 1]} : vector<8x128xf32> to vector<8x32xf32>
    %95 = arith.mulf %92, %57 : vector<8x32xf32>
    %96 = arith.mulf %91, %93 : vector<8x32xf32>
    %97 = arith.addf %95, %96 : vector<8x32xf32>
    %98 = math.tanh %97 : vector<8x32xf32>
    %99 = arith.mulf %94, %98 : vector<8x32xf32>
    %100 = arith.truncf %99 : vector<8x32xf32> to vector<8x32xbf16>
    %cst_37 = arith.constant dense<0.000000e+00> : vector<8x128xf32>
    %101 = tpu.matmul %100, %3, %cst_37 {dimension_numbers = #tpu.dot_dimension_numbers<[1], [0], [0], [1], [0, 0, 1, 1], [], []>} : vector<8x32xbf16>, vector<32x128xbf16>, vector<8x128xf32> -> vector<8x128xf32>
    %102 = vector.broadcast %5 : vector<1x128xf32> to vector<8x128xf32>
    %103 = arith.addf %101, %102 : vector<8x128xf32>
    %c16 = arith.constant 16 : index
    %c0_38 = arith.constant 0 : index
    %104 = vector.load %arg11[%c16, %c0_38] : memref<64x128xf32, #tpu.memory_space<vmem>>, vector<8x128xf32>
    %cst_39 = arith.constant dense<0.000000e+00> : vector<8x128xf32>
    %105 = tpu.matmul %82, %1, %cst_39 {dimension_numbers = #tpu.dot_dimension_numbers<[1], [0], [0], [1], [0, 0, 1, 1], [], []>} : vector<8x32xbf16>, vector<32x128xbf16>, vector<8x128xf32> -> vector<8x128xf32>
    %106 = arith.addf %104, %105 : vector<8x128xf32>
    %107 = arith.negf %106 : vector<8x128xf32>
    %108 = math.exp %107 : vector<8x128xf32>
    %cst_40 = arith.constant 1.000000e+00 : f32
    %109 = vector.broadcast %cst_40 : f32 to vector<8x128xf32>
    %110 = arith.addf %109, %108 : vector<8x128xf32>
    %111 = arith.divf %109, %110 : vector<8x128xf32>
    %112 = math.tanh %106 : vector<8x128xf32>
    %113 = vector.extract_strided_slice %111 {offsets = [0, 0], sizes = [8, 32], strides = [1, 1]} : vector<8x128xf32> to vector<8x32xf32>
    %114 = vector.extract_strided_slice %111 {offsets = [0, 32], sizes = [8, 32], strides = [1, 1]} : vector<8x128xf32> to vector<8x32xf32>
    %115 = vector.extract_strided_slice %112 {offsets = [0, 64], sizes = [8, 32], strides = [1, 1]} : vector<8x128xf32> to vector<8x32xf32>
    %116 = vector.extract_strided_slice %111 {offsets = [0, 96], sizes = [8, 32], strides = [1, 1]} : vector<8x128xf32> to vector<8x32xf32>
    %117 = arith.mulf %114, %79 : vector<8x32xf32>
    %118 = arith.mulf %113, %115 : vector<8x32xf32>
    %119 = arith.addf %117, %118 : vector<8x32xf32>
    %120 = math.tanh %119 : vector<8x32xf32>
    %121 = arith.mulf %116, %120 : vector<8x32xf32>
    %122 = arith.truncf %121 : vector<8x32xf32> to vector<8x32xbf16>
    %cst_41 = arith.constant dense<0.000000e+00> : vector<8x128xf32>
    %123 = tpu.matmul %122, %2, %cst_41 {dimension_numbers = #tpu.dot_dimension_numbers<[1], [0], [0], [1], [0, 0, 1, 1], [], []>} : vector<8x32xbf16>, vector<32x128xbf16>, vector<8x128xf32> -> vector<8x128xf32>
    %124 = arith.addf %103, %123 : vector<8x128xf32>
    %125 = arith.negf %124 : vector<8x128xf32>
    %126 = math.exp %125 : vector<8x128xf32>
    %cst_42 = arith.constant 1.000000e+00 : f32
    %127 = vector.broadcast %cst_42 : f32 to vector<8x128xf32>
    %128 = arith.addf %127, %126 : vector<8x128xf32>
    %129 = arith.divf %127, %128 : vector<8x128xf32>
    %130 = math.tanh %124 : vector<8x128xf32>
    %131 = vector.extract_strided_slice %129 {offsets = [0, 0], sizes = [8, 32], strides = [1, 1]} : vector<8x128xf32> to vector<8x32xf32>
    %132 = vector.extract_strided_slice %129 {offsets = [0, 32], sizes = [8, 32], strides = [1, 1]} : vector<8x128xf32> to vector<8x32xf32>
    %133 = vector.extract_strided_slice %130 {offsets = [0, 64], sizes = [8, 32], strides = [1, 1]} : vector<8x128xf32> to vector<8x32xf32>
    %134 = vector.extract_strided_slice %129 {offsets = [0, 96], sizes = [8, 32], strides = [1, 1]} : vector<8x128xf32> to vector<8x32xf32>
    %135 = arith.mulf %132, %97 : vector<8x32xf32>
    %136 = arith.mulf %131, %133 : vector<8x32xf32>
    %137 = arith.addf %135, %136 : vector<8x32xf32>
    %138 = math.tanh %137 : vector<8x32xf32>
    %139 = arith.mulf %134, %138 : vector<8x32xf32>
    %140 = arith.truncf %139 : vector<8x32xf32> to vector<8x32xbf16>
    %cst_43 = arith.constant dense<0.000000e+00> : vector<8x128xf32>
    %141 = tpu.matmul %140, %3, %cst_43 {dimension_numbers = #tpu.dot_dimension_numbers<[1], [0], [0], [1], [0, 0, 1, 1], [], []>} : vector<8x32xbf16>, vector<32x128xbf16>, vector<8x128xf32> -> vector<8x128xf32>
    %142 = vector.broadcast %5 : vector<1x128xf32> to vector<8x128xf32>
    %143 = arith.addf %141, %142 : vector<8x128xf32>
    %c24 = arith.constant 24 : index
    %c0_44 = arith.constant 0 : index
    %144 = vector.load %arg11[%c24, %c0_44] : memref<64x128xf32, #tpu.memory_space<vmem>>, vector<8x128xf32>
    %cst_45 = arith.constant dense<0.000000e+00> : vector<8x128xf32>
    %145 = tpu.matmul %122, %1, %cst_45 {dimension_numbers = #tpu.dot_dimension_numbers<[1], [0], [0], [1], [0, 0, 1, 1], [], []>} : vector<8x32xbf16>, vector<32x128xbf16>, vector<8x128xf32> -> vector<8x128xf32>
    %146 = arith.addf %144, %145 : vector<8x128xf32>
    %147 = arith.negf %146 : vector<8x128xf32>
    %148 = math.exp %147 : vector<8x128xf32>
    %cst_46 = arith.constant 1.000000e+00 : f32
    %149 = vector.broadcast %cst_46 : f32 to vector<8x128xf32>
    %150 = arith.addf %149, %148 : vector<8x128xf32>
    %151 = arith.divf %149, %150 : vector<8x128xf32>
    %152 = math.tanh %146 : vector<8x128xf32>
    %153 = vector.extract_strided_slice %151 {offsets = [0, 0], sizes = [8, 32], strides = [1, 1]} : vector<8x128xf32> to vector<8x32xf32>
    %154 = vector.extract_strided_slice %151 {offsets = [0, 32], sizes = [8, 32], strides = [1, 1]} : vector<8x128xf32> to vector<8x32xf32>
    %155 = vector.extract_strided_slice %152 {offsets = [0, 64], sizes = [8, 32], strides = [1, 1]} : vector<8x128xf32> to vector<8x32xf32>
    %156 = vector.extract_strided_slice %151 {offsets = [0, 96], sizes = [8, 32], strides = [1, 1]} : vector<8x128xf32> to vector<8x32xf32>
    %157 = arith.mulf %154, %119 : vector<8x32xf32>
    %158 = arith.mulf %153, %155 : vector<8x32xf32>
    %159 = arith.addf %157, %158 : vector<8x32xf32>
    %160 = math.tanh %159 : vector<8x32xf32>
    %161 = arith.mulf %156, %160 : vector<8x32xf32>
    %162 = arith.truncf %161 : vector<8x32xf32> to vector<8x32xbf16>
    %cst_47 = arith.constant dense<0.000000e+00> : vector<8x128xf32>
    %163 = tpu.matmul %162, %2, %cst_47 {dimension_numbers = #tpu.dot_dimension_numbers<[1], [0], [0], [1], [0, 0, 1, 1], [], []>} : vector<8x32xbf16>, vector<32x128xbf16>, vector<8x128xf32> -> vector<8x128xf32>
    %164 = arith.addf %143, %163 : vector<8x128xf32>
    %165 = arith.negf %164 : vector<8x128xf32>
    %166 = math.exp %165 : vector<8x128xf32>
    %cst_48 = arith.constant 1.000000e+00 : f32
    %167 = vector.broadcast %cst_48 : f32 to vector<8x128xf32>
    %168 = arith.addf %167, %166 : vector<8x128xf32>
    %169 = arith.divf %167, %168 : vector<8x128xf32>
    %170 = math.tanh %164 : vector<8x128xf32>
    %171 = vector.extract_strided_slice %169 {offsets = [0, 0], sizes = [8, 32], strides = [1, 1]} : vector<8x128xf32> to vector<8x32xf32>
    %172 = vector.extract_strided_slice %169 {offsets = [0, 32], sizes = [8, 32], strides = [1, 1]} : vector<8x128xf32> to vector<8x32xf32>
    %173 = vector.extract_strided_slice %170 {offsets = [0, 64], sizes = [8, 32], strides = [1, 1]} : vector<8x128xf32> to vector<8x32xf32>
    %174 = vector.extract_strided_slice %169 {offsets = [0, 96], sizes = [8, 32], strides = [1, 1]} : vector<8x128xf32> to vector<8x32xf32>
    %175 = arith.mulf %172, %137 : vector<8x32xf32>
    %176 = arith.mulf %171, %173 : vector<8x32xf32>
    %177 = arith.addf %175, %176 : vector<8x32xf32>
    %178 = math.tanh %177 : vector<8x32xf32>
    %179 = arith.mulf %174, %178 : vector<8x32xf32>
    %180 = arith.truncf %179 : vector<8x32xf32> to vector<8x32xbf16>
    %cst_49 = arith.constant dense<0.000000e+00> : vector<8x128xf32>
    %181 = tpu.matmul %180, %3, %cst_49 {dimension_numbers = #tpu.dot_dimension_numbers<[1], [0], [0], [1], [0, 0, 1, 1], [], []>} : vector<8x32xbf16>, vector<32x128xbf16>, vector<8x128xf32> -> vector<8x128xf32>
    %182 = vector.broadcast %5 : vector<1x128xf32> to vector<8x128xf32>
    %183 = arith.addf %181, %182 : vector<8x128xf32>
    %c32_50 = arith.constant 32 : index
    %c0_51 = arith.constant 0 : index
    %184 = vector.load %arg11[%c32_50, %c0_51] : memref<64x128xf32, #tpu.memory_space<vmem>>, vector<8x128xf32>
    %cst_52 = arith.constant dense<0.000000e+00> : vector<8x128xf32>
    %185 = tpu.matmul %162, %1, %cst_52 {dimension_numbers = #tpu.dot_dimension_numbers<[1], [0], [0], [1], [0, 0, 1, 1], [], []>} : vector<8x32xbf16>, vector<32x128xbf16>, vector<8x128xf32> -> vector<8x128xf32>
    %186 = arith.addf %184, %185 : vector<8x128xf32>
    %187 = arith.negf %186 : vector<8x128xf32>
    %188 = math.exp %187 : vector<8x128xf32>
    %cst_53 = arith.constant 1.000000e+00 : f32
    %189 = vector.broadcast %cst_53 : f32 to vector<8x128xf32>
    %190 = arith.addf %189, %188 : vector<8x128xf32>
    %191 = arith.divf %189, %190 : vector<8x128xf32>
    %192 = math.tanh %186 : vector<8x128xf32>
    %193 = vector.extract_strided_slice %191 {offsets = [0, 0], sizes = [8, 32], strides = [1, 1]} : vector<8x128xf32> to vector<8x32xf32>
    %194 = vector.extract_strided_slice %191 {offsets = [0, 32], sizes = [8, 32], strides = [1, 1]} : vector<8x128xf32> to vector<8x32xf32>
    %195 = vector.extract_strided_slice %192 {offsets = [0, 64], sizes = [8, 32], strides = [1, 1]} : vector<8x128xf32> to vector<8x32xf32>
    %196 = vector.extract_strided_slice %191 {offsets = [0, 96], sizes = [8, 32], strides = [1, 1]} : vector<8x128xf32> to vector<8x32xf32>
    %197 = arith.mulf %194, %159 : vector<8x32xf32>
    %198 = arith.mulf %193, %195 : vector<8x32xf32>
    %199 = arith.addf %197, %198 : vector<8x32xf32>
    %200 = math.tanh %199 : vector<8x32xf32>
    %201 = arith.mulf %196, %200 : vector<8x32xf32>
    %202 = arith.truncf %201 : vector<8x32xf32> to vector<8x32xbf16>
    %cst_54 = arith.constant dense<0.000000e+00> : vector<8x128xf32>
    %203 = tpu.matmul %202, %2, %cst_54 {dimension_numbers = #tpu.dot_dimension_numbers<[1], [0], [0], [1], [0, 0, 1, 1], [], []>} : vector<8x32xbf16>, vector<32x128xbf16>, vector<8x128xf32> -> vector<8x128xf32>
    %204 = arith.addf %183, %203 : vector<8x128xf32>
    %205 = arith.negf %204 : vector<8x128xf32>
    %206 = math.exp %205 : vector<8x128xf32>
    %cst_55 = arith.constant 1.000000e+00 : f32
    %207 = vector.broadcast %cst_55 : f32 to vector<8x128xf32>
    %208 = arith.addf %207, %206 : vector<8x128xf32>
    %209 = arith.divf %207, %208 : vector<8x128xf32>
    %210 = math.tanh %204 : vector<8x128xf32>
    %211 = vector.extract_strided_slice %209 {offsets = [0, 0], sizes = [8, 32], strides = [1, 1]} : vector<8x128xf32> to vector<8x32xf32>
    %212 = vector.extract_strided_slice %209 {offsets = [0, 32], sizes = [8, 32], strides = [1, 1]} : vector<8x128xf32> to vector<8x32xf32>
    %213 = vector.extract_strided_slice %210 {offsets = [0, 64], sizes = [8, 32], strides = [1, 1]} : vector<8x128xf32> to vector<8x32xf32>
    %214 = vector.extract_strided_slice %209 {offsets = [0, 96], sizes = [8, 32], strides = [1, 1]} : vector<8x128xf32> to vector<8x32xf32>
    %215 = arith.mulf %212, %177 : vector<8x32xf32>
    %216 = arith.mulf %211, %213 : vector<8x32xf32>
    %217 = arith.addf %215, %216 : vector<8x32xf32>
    %218 = math.tanh %217 : vector<8x32xf32>
    %219 = arith.mulf %214, %218 : vector<8x32xf32>
    %220 = arith.truncf %219 : vector<8x32xf32> to vector<8x32xbf16>
    %cst_56 = arith.constant dense<0.000000e+00> : vector<8x128xf32>
    %221 = tpu.matmul %220, %3, %cst_56 {dimension_numbers = #tpu.dot_dimension_numbers<[1], [0], [0], [1], [0, 0, 1, 1], [], []>} : vector<8x32xbf16>, vector<32x128xbf16>, vector<8x128xf32> -> vector<8x128xf32>
    %222 = vector.broadcast %5 : vector<1x128xf32> to vector<8x128xf32>
    %223 = arith.addf %221, %222 : vector<8x128xf32>
    %c40 = arith.constant 40 : index
    %c0_57 = arith.constant 0 : index
    %224 = vector.load %arg11[%c40, %c0_57] : memref<64x128xf32, #tpu.memory_space<vmem>>, vector<8x128xf32>
    %cst_58 = arith.constant dense<0.000000e+00> : vector<8x128xf32>
    %225 = tpu.matmul %202, %1, %cst_58 {dimension_numbers = #tpu.dot_dimension_numbers<[1], [0], [0], [1], [0, 0, 1, 1], [], []>} : vector<8x32xbf16>, vector<32x128xbf16>, vector<8x128xf32> -> vector<8x128xf32>
    %226 = arith.addf %224, %225 : vector<8x128xf32>
    %227 = arith.negf %226 : vector<8x128xf32>
    %228 = math.exp %227 : vector<8x128xf32>
    %cst_59 = arith.constant 1.000000e+00 : f32
    %229 = vector.broadcast %cst_59 : f32 to vector<8x128xf32>
    %230 = arith.addf %229, %228 : vector<8x128xf32>
    %231 = arith.divf %229, %230 : vector<8x128xf32>
    %232 = math.tanh %226 : vector<8x128xf32>
    %233 = vector.extract_strided_slice %231 {offsets = [0, 0], sizes = [8, 32], strides = [1, 1]} : vector<8x128xf32> to vector<8x32xf32>
    %234 = vector.extract_strided_slice %231 {offsets = [0, 32], sizes = [8, 32], strides = [1, 1]} : vector<8x128xf32> to vector<8x32xf32>
    %235 = vector.extract_strided_slice %232 {offsets = [0, 64], sizes = [8, 32], strides = [1, 1]} : vector<8x128xf32> to vector<8x32xf32>
    %236 = vector.extract_strided_slice %231 {offsets = [0, 96], sizes = [8, 32], strides = [1, 1]} : vector<8x128xf32> to vector<8x32xf32>
    %237 = arith.mulf %234, %199 : vector<8x32xf32>
    %238 = arith.mulf %233, %235 : vector<8x32xf32>
    %239 = arith.addf %237, %238 : vector<8x32xf32>
    %240 = math.tanh %239 : vector<8x32xf32>
    %241 = arith.mulf %236, %240 : vector<8x32xf32>
    %242 = arith.truncf %241 : vector<8x32xf32> to vector<8x32xbf16>
    %cst_60 = arith.constant dense<0.000000e+00> : vector<8x128xf32>
    %243 = tpu.matmul %242, %2, %cst_60 {dimension_numbers = #tpu.dot_dimension_numbers<[1], [0], [0], [1], [0, 0, 1, 1], [], []>} : vector<8x32xbf16>, vector<32x128xbf16>, vector<8x128xf32> -> vector<8x128xf32>
    %244 = arith.addf %223, %243 : vector<8x128xf32>
    %245 = arith.negf %244 : vector<8x128xf32>
    %246 = math.exp %245 : vector<8x128xf32>
    %cst_61 = arith.constant 1.000000e+00 : f32
    %247 = vector.broadcast %cst_61 : f32 to vector<8x128xf32>
    %248 = arith.addf %247, %246 : vector<8x128xf32>
    %249 = arith.divf %247, %248 : vector<8x128xf32>
    %250 = math.tanh %244 : vector<8x128xf32>
    %251 = vector.extract_strided_slice %249 {offsets = [0, 0], sizes = [8, 32], strides = [1, 1]} : vector<8x128xf32> to vector<8x32xf32>
    %252 = vector.extract_strided_slice %249 {offsets = [0, 32], sizes = [8, 32], strides = [1, 1]} : vector<8x128xf32> to vector<8x32xf32>
    %253 = vector.extract_strided_slice %250 {offsets = [0, 64], sizes = [8, 32], strides = [1, 1]} : vector<8x128xf32> to vector<8x32xf32>
    %254 = vector.extract_strided_slice %249 {offsets = [0, 96], sizes = [8, 32], strides = [1, 1]} : vector<8x128xf32> to vector<8x32xf32>
    %255 = arith.mulf %252, %217 : vector<8x32xf32>
    %256 = arith.mulf %251, %253 : vector<8x32xf32>
    %257 = arith.addf %255, %256 : vector<8x32xf32>
    %258 = math.tanh %257 : vector<8x32xf32>
    %259 = arith.mulf %254, %258 : vector<8x32xf32>
    %260 = arith.truncf %259 : vector<8x32xf32> to vector<8x32xbf16>
    %cst_62 = arith.constant dense<0.000000e+00> : vector<8x128xf32>
    %261 = tpu.matmul %260, %3, %cst_62 {dimension_numbers = #tpu.dot_dimension_numbers<[1], [0], [0], [1], [0, 0, 1, 1], [], []>} : vector<8x32xbf16>, vector<32x128xbf16>, vector<8x128xf32> -> vector<8x128xf32>
    %262 = vector.broadcast %5 : vector<1x128xf32> to vector<8x128xf32>
    %263 = arith.addf %261, %262 : vector<8x128xf32>
    %c48 = arith.constant 48 : index
    %c0_63 = arith.constant 0 : index
    %264 = vector.load %arg11[%c48, %c0_63] : memref<64x128xf32, #tpu.memory_space<vmem>>, vector<8x128xf32>
    %cst_64 = arith.constant dense<0.000000e+00> : vector<8x128xf32>
    %265 = tpu.matmul %242, %1, %cst_64 {dimension_numbers = #tpu.dot_dimension_numbers<[1], [0], [0], [1], [0, 0, 1, 1], [], []>} : vector<8x32xbf16>, vector<32x128xbf16>, vector<8x128xf32> -> vector<8x128xf32>
    %266 = arith.addf %264, %265 : vector<8x128xf32>
    %267 = arith.negf %266 : vector<8x128xf32>
    %268 = math.exp %267 : vector<8x128xf32>
    %cst_65 = arith.constant 1.000000e+00 : f32
    %269 = vector.broadcast %cst_65 : f32 to vector<8x128xf32>
    %270 = arith.addf %269, %268 : vector<8x128xf32>
    %271 = arith.divf %269, %270 : vector<8x128xf32>
    %272 = math.tanh %266 : vector<8x128xf32>
    %273 = vector.extract_strided_slice %271 {offsets = [0, 0], sizes = [8, 32], strides = [1, 1]} : vector<8x128xf32> to vector<8x32xf32>
    %274 = vector.extract_strided_slice %271 {offsets = [0, 32], sizes = [8, 32], strides = [1, 1]} : vector<8x128xf32> to vector<8x32xf32>
    %275 = vector.extract_strided_slice %272 {offsets = [0, 64], sizes = [8, 32], strides = [1, 1]} : vector<8x128xf32> to vector<8x32xf32>
    %276 = vector.extract_strided_slice %271 {offsets = [0, 96], sizes = [8, 32], strides = [1, 1]} : vector<8x128xf32> to vector<8x32xf32>
    %277 = arith.mulf %274, %239 : vector<8x32xf32>
    %278 = arith.mulf %273, %275 : vector<8x32xf32>
    %279 = arith.addf %277, %278 : vector<8x32xf32>
    %280 = math.tanh %279 : vector<8x32xf32>
    %281 = arith.mulf %276, %280 : vector<8x32xf32>
    %282 = arith.truncf %281 : vector<8x32xf32> to vector<8x32xbf16>
    %cst_66 = arith.constant dense<0.000000e+00> : vector<8x128xf32>
    %283 = tpu.matmul %282, %2, %cst_66 {dimension_numbers = #tpu.dot_dimension_numbers<[1], [0], [0], [1], [0, 0, 1, 1], [], []>} : vector<8x32xbf16>, vector<32x128xbf16>, vector<8x128xf32> -> vector<8x128xf32>
    %284 = arith.addf %263, %283 : vector<8x128xf32>
    %285 = arith.negf %284 : vector<8x128xf32>
    %286 = math.exp %285 : vector<8x128xf32>
    %cst_67 = arith.constant 1.000000e+00 : f32
    %287 = vector.broadcast %cst_67 : f32 to vector<8x128xf32>
    %288 = arith.addf %287, %286 : vector<8x128xf32>
    %289 = arith.divf %287, %288 : vector<8x128xf32>
    %290 = math.tanh %284 : vector<8x128xf32>
    %291 = vector.extract_strided_slice %289 {offsets = [0, 0], sizes = [8, 32], strides = [1, 1]} : vector<8x128xf32> to vector<8x32xf32>
    %292 = vector.extract_strided_slice %289 {offsets = [0, 32], sizes = [8, 32], strides = [1, 1]} : vector<8x128xf32> to vector<8x32xf32>
    %293 = vector.extract_strided_slice %290 {offsets = [0, 64], sizes = [8, 32], strides = [1, 1]} : vector<8x128xf32> to vector<8x32xf32>
    %294 = vector.extract_strided_slice %289 {offsets = [0, 96], sizes = [8, 32], strides = [1, 1]} : vector<8x128xf32> to vector<8x32xf32>
    %295 = arith.mulf %292, %257 : vector<8x32xf32>
    %296 = arith.mulf %291, %293 : vector<8x32xf32>
    %297 = arith.addf %295, %296 : vector<8x32xf32>
    %298 = math.tanh %297 : vector<8x32xf32>
    %299 = arith.mulf %294, %298 : vector<8x32xf32>
    %300 = arith.truncf %299 : vector<8x32xf32> to vector<8x32xbf16>
    %cst_68 = arith.constant dense<0.000000e+00> : vector<8x128xf32>
    %301 = tpu.matmul %300, %3, %cst_68 {dimension_numbers = #tpu.dot_dimension_numbers<[1], [0], [0], [1], [0, 0, 1, 1], [], []>} : vector<8x32xbf16>, vector<32x128xbf16>, vector<8x128xf32> -> vector<8x128xf32>
    %302 = vector.broadcast %5 : vector<1x128xf32> to vector<8x128xf32>
    %303 = arith.addf %301, %302 : vector<8x128xf32>
    %c56 = arith.constant 56 : index
    %c0_69 = arith.constant 0 : index
    %304 = vector.load %arg11[%c56, %c0_69] : memref<64x128xf32, #tpu.memory_space<vmem>>, vector<8x128xf32>
    %cst_70 = arith.constant dense<0.000000e+00> : vector<8x128xf32>
    %305 = tpu.matmul %282, %1, %cst_70 {dimension_numbers = #tpu.dot_dimension_numbers<[1], [0], [0], [1], [0, 0, 1, 1], [], []>} : vector<8x32xbf16>, vector<32x128xbf16>, vector<8x128xf32> -> vector<8x128xf32>
    %306 = arith.addf %304, %305 : vector<8x128xf32>
    %307 = arith.negf %306 : vector<8x128xf32>
    %308 = math.exp %307 : vector<8x128xf32>
    %cst_71 = arith.constant 1.000000e+00 : f32
    %309 = vector.broadcast %cst_71 : f32 to vector<8x128xf32>
    %310 = arith.addf %309, %308 : vector<8x128xf32>
    %311 = arith.divf %309, %310 : vector<8x128xf32>
    %312 = math.tanh %306 : vector<8x128xf32>
    %313 = vector.extract_strided_slice %311 {offsets = [0, 0], sizes = [8, 32], strides = [1, 1]} : vector<8x128xf32> to vector<8x32xf32>
    %314 = vector.extract_strided_slice %311 {offsets = [0, 32], sizes = [8, 32], strides = [1, 1]} : vector<8x128xf32> to vector<8x32xf32>
    %315 = vector.extract_strided_slice %312 {offsets = [0, 64], sizes = [8, 32], strides = [1, 1]} : vector<8x128xf32> to vector<8x32xf32>
    %316 = vector.extract_strided_slice %311 {offsets = [0, 96], sizes = [8, 32], strides = [1, 1]} : vector<8x128xf32> to vector<8x32xf32>
    %317 = arith.mulf %314, %279 : vector<8x32xf32>
    %318 = arith.mulf %313, %315 : vector<8x32xf32>
    %319 = arith.addf %317, %318 : vector<8x32xf32>
    %320 = math.tanh %319 : vector<8x32xf32>
    %321 = arith.mulf %316, %320 : vector<8x32xf32>
    %322 = arith.truncf %321 : vector<8x32xf32> to vector<8x32xbf16>
    %cst_72 = arith.constant dense<0.000000e+00> : vector<8x128xf32>
    %323 = tpu.matmul %322, %2, %cst_72 {dimension_numbers = #tpu.dot_dimension_numbers<[1], [0], [0], [1], [0, 0, 1, 1], [], []>} : vector<8x32xbf16>, vector<32x128xbf16>, vector<8x128xf32> -> vector<8x128xf32>
    %324 = arith.addf %303, %323 : vector<8x128xf32>
    %325 = arith.negf %324 : vector<8x128xf32>
    %326 = math.exp %325 : vector<8x128xf32>
    %cst_73 = arith.constant 1.000000e+00 : f32
    %327 = vector.broadcast %cst_73 : f32 to vector<8x128xf32>
    %328 = arith.addf %327, %326 : vector<8x128xf32>
    %329 = arith.divf %327, %328 : vector<8x128xf32>
    %330 = math.tanh %324 : vector<8x128xf32>
    %331 = vector.extract_strided_slice %329 {offsets = [0, 0], sizes = [8, 32], strides = [1, 1]} : vector<8x128xf32> to vector<8x32xf32>
    %332 = vector.extract_strided_slice %329 {offsets = [0, 32], sizes = [8, 32], strides = [1, 1]} : vector<8x128xf32> to vector<8x32xf32>
    %333 = vector.extract_strided_slice %330 {offsets = [0, 64], sizes = [8, 32], strides = [1, 1]} : vector<8x128xf32> to vector<8x32xf32>
    %334 = vector.extract_strided_slice %329 {offsets = [0, 96], sizes = [8, 32], strides = [1, 1]} : vector<8x128xf32> to vector<8x32xf32>
    %335 = arith.mulf %332, %297 : vector<8x32xf32>
    %336 = arith.mulf %331, %333 : vector<8x32xf32>
    %337 = arith.addf %335, %336 : vector<8x32xf32>
    %338 = math.tanh %337 : vector<8x32xf32>
    %339 = arith.mulf %334, %338 : vector<8x32xf32>
    %c0_74 = arith.constant 0 : index
    %c0_75 = arith.constant 0 : index
    %340 = vector.load %arg6[%c0_74, %c0_75] : memref<32x10xf32, #tpu.memory_space<vmem>>, vector<32x10xf32>
    %cst_76 = arith.constant dense<0.000000e+00> : vector<8x10xf32>
    %341 = tpu.matmul %339, %340, %cst_76 {dimension_numbers = #tpu.dot_dimension_numbers<[1], [0], [0], [1], [0, 0, 1, 1], [], []>} : vector<8x32xf32>, vector<32x10xf32>, vector<8x10xf32> -> vector<8x10xf32>
    %c0_77 = arith.constant 0 : index
    %c0_78 = arith.constant 0 : index
    %342 = vector.load %arg7[%c0_77, %c0_78] : memref<1x10xf32, #tpu.memory_space<vmem>>, vector<1x10xf32>
    %343 = vector.broadcast %342 : vector<1x10xf32> to vector<8x10xf32>
    %344 = arith.addf %341, %343 : vector<8x10xf32>
    %345 = math.tanh %344 : vector<8x10xf32>
    %c0_79 = arith.constant 0 : index
    %c0_80 = arith.constant 0 : index
    %346 = vector.load %arg8[%c0_79, %c0_80] : memref<10x4xf32, #tpu.memory_space<vmem>>, vector<10x4xf32>
    %cst_81 = arith.constant dense<0.000000e+00> : vector<8x4xf32>
    %347 = tpu.matmul %345, %346, %cst_81 {dimension_numbers = #tpu.dot_dimension_numbers<[1], [0], [0], [1], [0, 0, 1, 1], [], []>} : vector<8x10xf32>, vector<10x4xf32>, vector<8x4xf32> -> vector<8x4xf32>
    %c0_82 = arith.constant 0 : index
    %c0_83 = arith.constant 0 : index
    %348 = vector.load %arg9[%c0_82, %c0_83] : memref<1x4xf32, #tpu.memory_space<vmem>>, vector<1x4xf32>
    %349 = vector.broadcast %348 : vector<1x4xf32> to vector<8x4xf32>
    %350 = arith.addf %347, %349 : vector<8x4xf32>
    %c0_84 = arith.constant 0 : index
    %c0_85 = arith.constant 0 : index
    %351 = vector.load %arg10[%c0_84, %c0_85] : memref<8x4xf32, #tpu.memory_space<vmem>>, vector<8x4xf32>
    tpu.vector_store %arg10[%c0_84, %c0_85], %350 {strides = array<i32>} : memref<8x4xf32, #tpu.memory_space<vmem>>, vector<8x4xf32>,
    return
  }
}

</mosaic_0001>

<llo_original>
// kernel: tpu_custom_call.1
$region0: #{tpu_custom_call.1}
  #allocation0 [shape = 'u32[]', space=smem, size = 0x4, offset = 0x4, fixed_abs, tag = 'smem constant byte address 0x4 - core index']
  #allocation1 [shape = 'u32[72,128]{1,0:T(1,128)}', space=vmem, size = 0x9000, scoped, tag = 'internal scratch']
  #allocation2 [shape = 'f32[64,128]{1,0:T(8,128)}', space=vmem, size = 0x8000, scoped, tag = 'scratch operand']
  %s0 = inlined_call_operand.vmem [shape: bf16[64,32], index: 0, kind: input, shape index: {}]
  %s1 = inlined_call_operand.vmem [shape: f32[2,8,32], index: 1, kind: input, shape index: {}]
  %s2 = inlined_call_operand.vmem [shape: f32[2,8,32], index: 2, kind: input, shape index: {}]
  %s3 = inlined_call_operand.vmem [shape: bf16[32,128], index: 3, kind: input, shape index: {}]
  %s4 = inlined_call_operand.vmem [shape: bf16[96,128], index: 4, kind: input, shape index: {}]
  %s5 = inlined_call_operand.vmem [shape: f32[2,128], index: 5, kind: input, shape index: {}]
  %s6 = inlined_call_operand.vmem [shape: f32[32,10], index: 6, kind: input, shape index: {}]
  %s7 = inlined_call_operand.vmem [shape: f32[1,10], index: 7, kind: input, shape index: {}]
  %s8 = inlined_call_operand.vmem [shape: f32[10,4], index: 8, kind: input, shape index: {}]
  %s9 = inlined_call_operand.vmem [shape: f32[1,4], index: 9, kind: input, shape index: {}]
  %s10 = inlined_call_operand.vmem [shape: f32[8,4], index: 10, kind: output, shape index: {}]
  %s11 = sld [smem:[#allocation0]]
  $region50: #{tpu_custom_call.1} parent=0
    _
  %s13 = ssub.s32 1, %s11
  %s14 = scalar_select 0, %s13, %s11
  // Predicated region
  $region2: #{tpu_custom_call.1} parent=0 // pred_check
    _
  $region3: #{tpu_custom_call.1} parent=0 // pred_check_branch
    %16 = sbr.rel (0) target = $region5
  $region4: #{tpu_custom_call.1} parent=0 // pred_region
    _
  $region5: #{tpu_custom_call.1} parent=0 // pred_fallthru
    _
  // Predicated region
  $region6: #{tpu_custom_call.1} parent=0 // pred_check
    _
  $region7: #{tpu_custom_call.1} parent=0 // pred_check_branch
    %18 = sbr.rel (0) target = $region9
  $region8: #{tpu_custom_call.1} parent=0 // pred_region
    _
  $region9: #{tpu_custom_call.1} parent=0 // pred_fallthru
    _
  // Predicated region
  $region10: #{tpu_custom_call.1} parent=0 // pred_check
    _
  $region11: #{tpu_custom_call.1} parent=0 // pred_check_branch
    %20 = sbr.rel (0) target = $region13
  $region12: #{tpu_custom_call.1} parent=0 // pred_region
    _
  $region13: #{tpu_custom_call.1} parent=0 // pred_fallthru
    _
  // Predicated region
  $region14: #{tpu_custom_call.1} parent=0 // pred_check
    _
  $region15: #{tpu_custom_call.1} parent=0 // pred_check_branch
    %22 = sbr.rel (0) target = $region17
  $region16: #{tpu_custom_call.1} parent=0 // pred_region
    _
  $region17: #{tpu_custom_call.1} parent=0 // pred_fallthru
    _
  // Predicated region
  $region18: #{tpu_custom_call.1} parent=0 // pred_check
    _
  $region19: #{tpu_custom_call.1} parent=0 // pred_check_branch
    %24 = sbr.rel (0) target = $region21
  $region20: #{tpu_custom_call.1} parent=0 // pred_region
    _
  $region21: #{tpu_custom_call.1} parent=0 // pred_fallthru
    _
  // Predicated region
  $region22: #{tpu_custom_call.1} parent=0 // pred_check
    _
  $region23: #{tpu_custom_call.1} parent=0 // pred_check_branch
    %26 = sbr.rel (0) target = $region25
  $region24: #{tpu_custom_call.1} parent=0 // pred_region
    _
  $region25: #{tpu_custom_call.1} parent=0 // pred_fallthru
    _
  // Predicated region
  $region26: #{tpu_custom_call.1} parent=0 // pred_check
    _
  $region27: #{tpu_custom_call.1} parent=0 // pred_check_branch
    %28 = sbr.rel (0) target = $region29
  $region28: #{tpu_custom_call.1} parent=0 // pred_region
    _
  $region29: #{tpu_custom_call.1} parent=0 // pred_fallthru
    _
  // Predicated region
  $region30: #{tpu_custom_call.1} parent=0 // pred_check
    _
  $region31: #{tpu_custom_call.1} parent=0 // pred_check_branch
    %30 = sbr.rel (0) target = $region33
  $region32: #{tpu_custom_call.1} parent=0 // pred_region
    _
  $region33: #{tpu_custom_call.1} parent=0 // pred_fallthru
    _
  // Predicated region
  $region34: #{tpu_custom_call.1} parent=0 // pred_check
    _
  $region35: #{tpu_custom_call.1} parent=0 // pred_check_branch
    %32 = sbr.rel (0) target = $region37
  $region36: #{tpu_custom_call.1} parent=0 // pred_region
    _
  $region37: #{tpu_custom_call.1} parent=0 // pred_fallthru
    _
  // Predicated region
  $region38: #{tpu_custom_call.1} parent=0 // pred_check
    _
  $region39: #{tpu_custom_call.1} parent=0 // pred_check_branch
    %34 = sbr.rel (0) target = $region41
  $region40: #{tpu_custom_call.1} parent=0 // pred_region
    _
  $region41: #{tpu_custom_call.1} parent=0 // pred_fallthru
    _
  %v36 = vld [vmem:[%s3] sm:$0xf]
  %v37 = vld [vmem:[%s3 + $0x4] sm:$0xf]
  %v38 = vld [vmem:[%s3 + $0x8] sm:$0xf]
  %v39 = vld [vmem:[%s3 + $0xc] sm:$0xf]
  %v40 = vld [vmem:[%s4] sm:$0xf]
  %v41 = vld [vmem:[%s4 + $0x4] sm:$0xf]
  %v42 = vld [vmem:[%s4 + $0x8] sm:$0xf]
  %v43 = vld [vmem:[%s4 + $0xc] sm:$0xf]
  %v44 = vld [vmem:[%s4 + $0x10] sm:$0xf]
  %v45 = vld [vmem:[%s4 + $0x14] sm:$0xf]
  %v46 = vld [vmem:[%s4 + $0x18] sm:$0xf]
  %v47 = vld [vmem:[%s4 + $0x1c] sm:$0xf]
  %v48 = vld [vmem:[%s4 + $0x20] sm:$0xf]
  %v49 = vld [vmem:[%s4 + $0x24] sm:$0xf]
  %v50 = vld [vmem:[%s4 + $0x28] sm:$0xf]
  %v51 = vld [vmem:[%s4 + $0x2c] sm:$0xf]
  %v52 = vld [vmem:[%s5] sm:$0x1]
  %v53 = vld [vmem:[%s5 + $0x1] sm:$0x1]
  %v54 = vld [vmem:[%s0] sm:$0xf]
  %v55 = vld [vmem:[%s0 + $0x4] sm:$0xf]
  %v56 = vld [vmem:[%s0 + $0x8] sm:$0xf]
  %v57 = vld [vmem:[%s0 + $0xc] sm:$0xf]
  %v58 = vld [vmem:[%s0 + $0x10] sm:$0xf]
  %v59 = vld [vmem:[%s0 + $0x14] sm:$0xf]
  %v60 = vld [vmem:[%s0 + $0x18] sm:$0xf]
  %v61 = vld [vmem:[%s0 + $0x1c] sm:$0xf]
  %v62 = vperm.slane %v52, 0
  %v71 = vunpack.c.l.b16 %v54
  %v72 = vunpack.c.l.b16 %v55
  %v73 = vunpack.c.l.b16 %v56
  %v74 = vunpack.c.l.b16 %v57
  %v75 = vunpack.c.l.b16 %v58
  %v76 = vunpack.c.l.b16 %v59
  %v77 = vunpack.c.l.b16 %v60
  %v78 = vunpack.c.l.b16 %v61
  %v79 = vpack.c.b16 %v72, %v71
  %v80 = vpack.c.b16 %v74, %v73
  %v81 = vpack.c.b16 %v76, %v75
  %v82 = vpack.c.b16 %v78, %v77
  %v87 = vunpack.c.l.b16 %v36
  %v88 = vunpack.c.l.b16 %v37
  %v89 = vunpack.c.l.b16 %v38
  %v90 = vunpack.c.l.b16 %v39
  %v91 = vpack.c.b16 %v88, %v87
  %v92 = vpack.c.b16 %v90, %v89
  %vm95 = vcmask 261120
  %v97 = vsel %vm95, %v79, 0
  %v100 = vsel %vm95, %v80, 0
  %v103 = vsel %vm95, %v81, 0
  %v106 = vsel %vm95, %v82, 0
  %108 = vmatpush.bf16.msra.mxu0 0
  %109 = vmatpush.bf16.msra.mxu0 0
  %110 = vmatpush.bf16.msra.mxu0 0
  %111 = vmatpush.bf16.msra.mxu0 0
  %112 = vmatpush.bf16.msra.mxu0 0
  %113 = vmatpush.bf16.msra.mxu0 0
  %114 = vmatpush.bf16.msra.mxu0 %v92
  %115 = vmatpush.bf16.msra.mxu0 %v91
  %116 = vmatmul.bf16.gmra.mxu0 %v97
  %v117 = vpop.f32.mrf.mxu0
  %v118 = vadd.f32 %v62, %v117
  %v119 = vpop.f32.mrf.mxu0
  %v120 = vadd.f32 %v62, %v119
  %121 = vmatmul.bf16.gmra.mxu0 %v100
  %v122 = vpop.f32.mrf.mxu0
  %v123 = vadd.f32 %v62, %v122
  %v124 = vpop.f32.mrf.mxu0
  %v125 = vadd.f32 %v62, %v124
  %126 = vmatmul.bf16.gmra.mxu0 %v103
  %v127 = vpop.f32.mrf.mxu0
  %v128 = vadd.f32 %v62, %v127
  %v129 = vpop.f32.mrf.mxu0
  %v130 = vadd.f32 %v62, %v129
  %131 = vmatmul.bf16.gmra.mxu0 %v106
  %v132 = vpop.f32.mrf.mxu0
  %v133 = vadd.f32 %v62, %v132
  %v134 = vpop.f32.mrf.mxu0
  %v135 = vadd.f32 %v62, %v134
  %136 = vdwg.mxu0
  %137 = vst [vmem:[#allocation2] sm:$0xff] %v118
  %138 = vst [vmem:[#allocation2 + $0x8] sm:$0xff] %v120
  %139 = vst [vmem:[#allocation2 + $0x10] sm:$0xff] %v123
  %140 = vst [vmem:[#allocation2 + $0x18] sm:$0xff] %v125
  %141 = vst [vmem:[#allocation2 + $0x20] sm:$0xff] %v128
  %142 = vst [vmem:[#allocation2 + $0x28] sm:$0xff] %v130
  %143 = vst [vmem:[#allocation2 + $0x30] sm:$0xff] %v133
  %144 = vst [vmem:[#allocation2 + $0x38] sm:$0xff] %v135
  %v145 = vld [vmem:[%s1] sm:$0xff]
  %v146 = vld [vmem:[%s2] sm:$0xff]
  %s147 = scalar_lea.vmem %s1, 8
  %v148 = vld [vmem:[%s147] sm:$0xff]
  %s149 = scalar_lea.vmem %s2, 8
  %v150 = vld [vmem:[%s149] sm:$0xff]
  %v151 = vpack.c.bf16 %v145, %v145
  %v152 = vpack.c.bf16 %v148, %v148
  %v153 = vperm.slane %v53, 0
  %v158 = vunpack.c.l.b16 %v48
  %v159 = vunpack.c.l.b16 %v49
  %v160 = vunpack.c.l.b16 %v50
  %v161 = vunpack.c.l.b16 %v51
  %v162 = vpack.c.b16 %v159, %v158
  %v163 = vpack.c.b16 %v161, %v160
  %v167 = vsel %vm95, %v152, 0
  %169 = vmatpush.bf16.msra.mxu0 0
  %170 = vmatpush.bf16.msra.mxu0 0
  %171 = vmatpush.bf16.msra.mxu0 0
  %172 = vmatpush.bf16.msra.mxu0 0
  %173 = vmatpush.bf16.msra.mxu0 0
  %174 = vmatpush.bf16.msra.mxu0 0
  %175 = vmatpush.bf16.msra.mxu0 %v163
  %176 = vmatpush.bf16.msra.mxu0 %v162
  %177 = vmatmul.bf16.gmra.mxu0 %v167
  %v178 = vpop.f32.mrf.mxu0
  %v179 = vadd.f32 %v153, %v178
  %v180 = vpop.f32.mrf.mxu0
  %181 = vdwg.mxu0
  %v182 = vld [vmem:[#allocation2] sm:$0xff]
  %v187 = vunpack.c.l.b16 %v40
  %v188 = vunpack.c.l.b16 %v41
  %v189 = vunpack.c.l.b16 %v42
  %v190 = vunpack.c.l.b16 %v43
  %v191 = vpack.c.b16 %v188, %v187
  %v192 = vpack.c.b16 %v190, %v189
  %v196 = vsel %vm95, %v151, 0
  %198 = vmatpush.bf16.msra.mxu0 0
  %199 = vmatpush.bf16.msra.mxu0 0
  %200 = vmatpush.bf16.msra.mxu0 0
  %201 = vmatpush.bf16.msra.mxu0 0
  %202 = vmatpush.bf16.msra.mxu0 0
  %203 = vmatpush.bf16.msra.mxu0 0
  %204 = vmatpush.bf16.msra.mxu0 %v192
  %205 = vmatpush.bf16.msra.mxu0 %v191
  %206 = vmatmul.bf16.gmra.mxu0 %v196
  %v207 = vpop.f32.mrf.mxu0
  %v208 = vadd.f32 0.0, %v207
  %v209 = vpop.f32.mrf.mxu0
  %210 = vdwg.mxu0
  %v211 = vadd.f32 %v182, %v208
  %v212 = vxor.u32 %v211, 2147483648
  %v213 = vmul.f32 %v212, 1.442695
  %v214 = vpow.pop %v213
  %v215 = vadd.f32 %v214, 1.0
  %v216 = vrcp.pop %v215
  %v217 = vmul.f32 %v215, %v216
  %v218 = vsub.f32 1.0, %v217
  %v219 = vmul.f32 %v216, %v218
  %v220 = vadd.f32 %v216, %v219
  %vm221 = vweird.f32 %v215
  %vm222 = vweird.f32 %v216
  %vm223 = vmor %vm221, %vm222
  %v224 = vsel %vm223, %v216, %v220
  %v225 = vand.u32 2147483647, %v215
  %vm226 = vcmp.eq.f32.partialorder %v225, 8.507059e+37
  %v227 = vand.u32 %v215, 2147483648
  %v228 = vor.u32 1.1754944e-38, %v227
  %v229 = vsel %vm226, %v228, %v224
  %v230 = vmul.f32 1.0, %v229
  %v231 = vtanh.pop %v211
  %233 = vrot.lane.b32.xlu0 %v146, 32
  %v234 = vpop.permute.xlu0 %233
  %v236 = vmul.f32 %v230, %v234
  %238 = vrot.lane.b32.xlu0 %v231, 64
  %v239 = vpop.permute.xlu0 %238
  %v241 = vmul.f32 %v230, %v239
  %243 = vrot.lane.b32.xlu0 %v241, 32
  %v244 = vpop.permute.xlu0 %243
  %v246 = vadd.f32 %v236, %v244
  %v247 = vtanh.pop %v246
  %249 = vrot.lane.b32.xlu0 %v247, 64
  %v250 = vpop.permute.xlu0 %249
  %v252 = vmul.f32 %v230, %v250
  %v253 = vpack.c.bf16 %v252, %v252
  %255 = vrot.lane.b32.xlu0 %v253, 32
  %v256 = vpop.permute.xlu0 %255
  %v261 = vunpack.c.l.b16 %v44
  %v262 = vunpack.c.l.b16 %v45
  %v263 = vunpack.c.l.b16 %v46
  %v264 = vunpack.c.l.b16 %v47
  %v265 = vpack.c.b16 %v262, %v261
  %v266 = vpack.c.b16 %v264, %v263
  %v270 = vsel %vm95, %v256, 0
  %272 = vmatpush.bf16.msra.mxu0 0
  %273 = vmatpush.bf16.msra.mxu0 0
  %274 = vmatpush.bf16.msra.mxu0 0
  %275 = vmatpush.bf16.msra.mxu0 0
  %276 = vmatpush.bf16.msra.mxu0 0
  %277 = vmatpush.bf16.msra.mxu0 0
  %278 = vmatpush.bf16.msra.mxu0 %v266
  %279 = vmatpush.bf16.msra.mxu0 %v265
  %280 = vmatmul.bf16.gmra.mxu0 %v270
  %v281 = vpop.f32.mrf.mxu0
  %v282 = vadd.f32 0.0, %v281
  %v283 = vpop.f32.mrf.mxu0
  %284 = vdwg.mxu0
  %v285 = vadd.f32 %v179, %v282
  %v286 = vxor.u32 %v285, 2147483648
  %v287 = vmul.f32 %v286, 1.442695
  %v288 = vpow.pop %v287
  %v289 = vadd.f32 %v288, 1.0
  %v290 = vrcp.pop %v289
  %v291 = vmul.f32 %v289, %v290
  %v292 = vsub.f32 1.0, %v291
  %v293 = vmul.f32 %v290, %v292
  %v294 = vadd.f32 %v290, %v293
  %vm295 = vweird.f32 %v289
  %vm296 = vweird.f32 %v290
  %vm297 = vmor %vm295, %vm296
  %v298 = vsel %vm297, %v290, %v294
  %v299 = vand.u32 2147483647, %v289
  %vm300 = vcmp.eq.f32.partialorder %v299, 8.507059e+37
  %v301 = vand.u32 %v289, 2147483648
  %v302 = vor.u32 1.1754944e-38, %v301
  %v303 = vsel %vm300, %v302, %v298
  %v304 = vmul.f32 1.0, %v303
  %v305 = vtanh.pop %v285
  %307 = vrot.lane.b32.xlu0 %v150, 32
  %v308 = vpop.permute.xlu0 %307
  %v310 = vmul.f32 %v304, %v308
  %312 = vrot.lane.b32.xlu0 %v305, 64
  %v313 = vpop.permute.xlu0 %312
  %v315 = vmul.f32 %v304, %v313
  %317 = vrot.lane.b32.xlu0 %v315, 32
  %v318 = vpop.permute.xlu0 %317
  %v320 = vadd.f32 %v310, %v318
  %v321 = vtanh.pop %v320
  %323 = vrot.lane.b32.xlu0 %v321, 64
  %v324 = vpop.permute.xlu0 %323
  %v326 = vmul.f32 %v304, %v324
  %v327 = vpack.c.bf16 %v326, %v326
  %329 = vrot.lane.b32.xlu0 %v327, 32
  %v330 = vpop.permute.xlu0 %329
  %v332 = vsel %vm95, %v330, 0
  %334 = vmatpush.bf16.msra.mxu0 0
  %335 = vmatpush.bf16.msra.mxu0 0
  %336 = vmatpush.bf16.msra.mxu0 0
  %337 = vmatpush.bf16.msra.mxu0 0
  %338 = vmatpush.bf16.msra.mxu0 0
  %339 = vmatpush.bf16.msra.mxu0 0
  %340 = vmatpush.bf16.msra.mxu0 %v163
  %341 = vmatpush.bf16.msra.mxu0 %v162
  %342 = vmatmul.bf16.gmra.mxu0 %v332
  %v343 = vpop.f32.mrf.mxu0
  %v344 = vadd.f32 %v153, %v343
  %v345 = vpop.f32.mrf.mxu0
  %346 = vdwg.mxu0
  %v347 = vld [vmem:[#allocation2 + $0x8] sm:$0xff]
  %348 = vmatpush.bf16.msra.mxu0 0
  %349 = vmatpush.bf16.msra.mxu0 0
  %350 = vmatpush.bf16.msra.mxu0 0
  %351 = vmatpush.bf16.msra.mxu0 0
  %352 = vmatpush.bf16.msra.mxu0 0
  %353 = vmatpush.bf16.msra.mxu0 0
  %354 = vmatpush.bf16.msra.mxu0 %v192
  %355 = vmatpush.bf16.msra.mxu0 %v191
  %356 = vmatmul.bf16.gmra.mxu0 %v270
  %v357 = vpop.f32.mrf.mxu0
  %v358 = vadd.f32 0.0, %v357
  %v359 = vpop.f32.mrf.mxu0
  %360 = vdwg.mxu0
  %v361 = vadd.f32 %v347, %v358
  %v362 = vxor.u32 %v361, 2147483648
  %v363 = vmul.f32 %v362, 1.442695
  %v364 = vpow.pop %v363
  %v365 = vadd.f32 %v364, 1.0
  %v366 = vrcp.pop %v365
  %v367 = vmul.f32 %v365, %v366
  %v368 = vsub.f32 1.0, %v367
  %v369 = vmul.f32 %v366, %v368
  %v370 = vadd.f32 %v366, %v369
  %vm371 = vweird.f32 %v365
  %vm372 = vweird.f32 %v366
  %vm373 = vmor %vm371, %vm372
  %v374 = vsel %vm373, %v366, %v370
  %v375 = vand.u32 2147483647, %v365
  %vm376 = vcmp.eq.f32.partialorder %v375, 8.507059e+37
  %v377 = vand.u32 %v365, 2147483648
  %v378 = vor.u32 1.1754944e-38, %v377
  %v379 = vsel %vm376, %v378, %v374
  %v380 = vmul.f32 1.0, %v379
  %v381 = vtanh.pop %v361
  %v382 = vmul.f32 %v380, %v246
  %384 = vrot.lane.b32.xlu0 %v381, 64
  %v385 = vpop.permute.xlu0 %384
  %v387 = vmul.f32 %v380, %v385
  %389 = vrot.lane.b32.xlu0 %v387, 32
  %v390 = vpop.permute.xlu0 %389
  %v392 = vadd.f32 %v382, %v390
  %v393 = vtanh.pop %v392
  %395 = vrot.lane.b32.xlu0 %v393, 64
  %v396 = vpop.permute.xlu0 %395
  %v398 = vmul.f32 %v380, %v396
  %v399 = vpack.c.bf16 %v398, %v398
  %401 = vrot.lane.b32.xlu0 %v399, 32
  %v402 = vpop.permute.xlu0 %401
  %v404 = vsel %vm95, %v402, 0
  %406 = vmatpush.bf16.msra.mxu0 0
  %407 = vmatpush.bf16.msra.mxu0 0
  %408 = vmatpush.bf16.msra.mxu0 0
  %409 = vmatpush.bf16.msra.mxu0 0
  %410 = vmatpush.bf16.msra.mxu0 0
  %411 = vmatpush.bf16.msra.mxu0 0
  %412 = vmatpush.bf16.msra.mxu0 %v266
  %413 = vmatpush.bf16.msra.mxu0 %v265
  %414 = vmatmul.bf16.gmra.mxu0 %v404
  %v415 = vpop.f32.mrf.mxu0
  %v416 = vadd.f32 0.0, %v415
  %v417 = vpop.f32.mrf.mxu0
  %418 = vdwg.mxu0
  %v419 = vadd.f32 %v344, %v416
  %v420 = vxor.u32 %v419, 2147483648
  %v421 = vmul.f32 %v420, 1.442695
  %v422 = vpow.pop %v421
  %v423 = vadd.f32 %v422, 1.0
  %v424 = vrcp.pop %v423
  %v425 = vmul.f32 %v423, %v424
  %v426 = vsub.f32 1.0, %v425
  %v427 = vmul.f32 %v424, %v426
  %v428 = vadd.f32 %v424, %v427
  %vm429 = vweird.f32 %v423
  %vm430 = vweird.f32 %v424
  %vm431 = vmor %vm429, %vm430
  %v432 = vsel %vm431, %v424, %v428
  %v433 = vand.u32 2147483647, %v423
  %vm434 = vcmp.eq.f32.partialorder %v433, 8.507059e+37
  %v435 = vand.u32 %v423, 2147483648
  %v436 = vor.u32 1.1754944e-38, %v435
  %v437 = vsel %vm434, %v436, %v432
  %v438 = vmul.f32 1.0, %v437
  %v439 = vtanh.pop %v419
  %v440 = vmul.f32 %v438, %v320
  %442 = vrot.lane.b32.xlu0 %v439, 64
  %v443 = vpop.permute.xlu0 %442
  %v445 = vmul.f32 %v438, %v443
  %447 = vrot.lane.b32.xlu0 %v445, 32
  %v448 = vpop.permute.xlu0 %447
  %v450 = vadd.f32 %v440, %v448
  %v451 = vtanh.pop %v450
  %453 = vrot.lane.b32.xlu0 %v451, 64
  %v454 = vpop.permute.xlu0 %453
  %v456 = vmul.f32 %v438, %v454
  %v457 = vpack.c.bf16 %v456, %v456
  %459 = vrot.lane.b32.xlu0 %v457, 32
  %v460 = vpop.permute.xlu0 %459
  %v462 = vsel %vm95, %v460, 0
  %464 = vmatpush.bf16.msra.mxu0 0
  %465 = vmatpush.bf16.msra.mxu0 0
  %466 = vmatpush.bf16.msra.mxu0 0
  %467 = vmatpush.bf16.msra.mxu0 0
  %468 = vmatpush.bf16.msra.mxu0 0
  %469 = vmatpush.bf16.msra.mxu0 0
  %470 = vmatpush.bf16.msra.mxu0 %v163
  %471 = vmatpush.bf16.msra.mxu0 %v162
  %472 = vmatmul.bf16.gmra.mxu0 %v462
  %v473 = vpop.f32.mrf.mxu0
  %v474 = vadd.f32 %v153, %v473
  %v475 = vpop.f32.mrf.mxu0
  %476 = vdwg.mxu0
  %v477 = vld [vmem:[#allocation2 + $0x10] sm:$0xff]
  %478 = vmatpush.bf16.msra.mxu0 0
  %479 = vmatpush.bf16.msra.mxu0 0
  %480 = vmatpush.bf16.msra.mxu0 0
  %481 = vmatpush.bf16.msra.mxu0 0
  %482 = vmatpush.bf16.msra.mxu0 0
  %483 = vmatpush.bf16.msra.mxu0 0
  %484 = vmatpush.bf16.msra.mxu0 %v192
  %485 = vmatpush.bf16.msra.mxu0 %v191
  %486 = vmatmul.bf16.gmra.mxu0 %v404
  %v487 = vpop.f32.mrf.mxu0
  %v488 = vadd.f32 0.0, %v487
  %v489 = vpop.f32.mrf.mxu0
  %490 = vdwg.mxu0
  %v491 = vadd.f32 %v477, %v488
  %v492 = vxor.u32 %v491, 2147483648
  %v493 = vmul.f32 %v492, 1.442695
  %v494 = vpow.pop %v493
  %v495 = vadd.f32 %v494, 1.0
  %v496 = vrcp.pop %v495
  %v497 = vmul.f32 %v495, %v496
  %v498 = vsub.f32 1.0, %v497
  %v499 = vmul.f32 %v496, %v498
  %v500 = vadd.f32 %v496, %v499
  %vm501 = vweird.f32 %v495
  %vm502 = vweird.f32 %v496
  %vm503 = vmor %vm501, %vm502
  %v504 = vsel %vm503, %v496, %v500
  %v505 = vand.u32 2147483647, %v495
  %vm506 = vcmp.eq.f32.partialorder %v505, 8.507059e+37
  %v507 = vand.u32 %v495, 2147483648
  %v508 = vor.u32 1.1754944e-38, %v507
  %v509 = vsel %vm506, %v508, %v504
  %v510 = vmul.f32 1.0, %v509
  %v511 = vtanh.pop %v491
  %v512 = vmul.f32 %v510, %v392
  %514 = vrot.lane.b32.xlu0 %v511, 64
  %v515 = vpop.permute.xlu0 %514
  %v517 = vmul.f32 %v510, %v515
  %519 = vrot.lane.b32.xlu0 %v517, 32
  %v520 = vpop.permute.xlu0 %519
  %v522 = vadd.f32 %v512, %v520
  %v523 = vtanh.pop %v522
  %525 = vrot.lane.b32.xlu0 %v523, 64
  %v526 = vpop.permute.xlu0 %525
  %v528 = vmul.f32 %v510, %v526
  %v529 = vpack.c.bf16 %v528, %v528
  %531 = vrot.lane.b32.xlu0 %v529, 32
  %v532 = vpop.permute.xlu0 %531
  %v534 = vsel %vm95, %v532, 0
  %536 = vmatpush.bf16.msra.mxu0 0
  %537 = vmatpush.bf16.msra.mxu0 0
  %538 = vmatpush.bf16.msra.mxu0 0
  %539 = vmatpush.bf16.msra.mxu0 0
  %540 = vmatpush.bf16.msra.mxu0 0
  %541 = vmatpush.bf16.msra.mxu0 0
  %542 = vmatpush.bf16.msra.mxu0 %v266
  %543 = vmatpush.bf16.msra.mxu0 %v265
  %544 = vmatmul.bf16.gmra.mxu0 %v534
  %v545 = vpop.f32.mrf.mxu0
  %v546 = vadd.f32 0.0, %v545
  %v547 = vpop.f32.mrf.mxu0
  %548 = vdwg.mxu0
  %v549 = vadd.f32 %v474, %v546
  %v550 = vxor.u32 %v549, 2147483648
  %v551 = vmul.f32 %v550, 1.442695
  %v552 = vpow.pop %v551
  %v553 = vadd.f32 %v552, 1.0
  %v554 = vrcp.pop %v553
  %v555 = vmul.f32 %v553, %v554
  %v556 = vsub.f32 1.0, %v555
  %v557 = vmul.f32 %v554, %v556
  %v558 = vadd.f32 %v554, %v557
  %vm559 = vweird.f32 %v553
  %vm560 = vweird.f32 %v554
  %vm561 = vmor %vm559, %vm560
  %v562 = vsel %vm561, %v554, %v558
  %v563 = vand.u32 2147483647, %v553
  %vm564 = vcmp.eq.f32.partialorder %v563, 8.507059e+37
  %v565 = vand.u32 %v553, 2147483648
  %v566 = vor.u32 1.1754944e-38, %v565
  %v567 = vsel %vm564, %v566, %v562
  %v568 = vmul.f32 1.0, %v567
  %v569 = vtanh.pop %v549
  %v570 = vmul.f32 %v568, %v450
  %572 = vrot.lane.b32.xlu0 %v569, 64
  %v573 = vpop.permute.xlu0 %572
  %v575 = vmul.f32 %v568, %v573
  %577 = vrot.lane.b32.xlu0 %v575, 32
  %v578 = vpop.permute.xlu0 %577
  %v580 = vadd.f32 %v570, %v578
  %v581 = vtanh.pop %v580
  %583 = vrot.lane.b32.xlu0 %v581, 64
  %v584 = vpop.permute.xlu0 %583
  %v586 = vmul.f32 %v568, %v584
  %v587 = vpack.c.bf16 %v586, %v586
  %589 = vrot.lane.b32.xlu0 %v587, 32
  %v590 = vpop.permute.xlu0 %589
  %v592 = vsel %vm95, %v590, 0
  %594 = vmatpush.bf16.msra.mxu0 0
  %595 = vmatpush.bf16.msra.mxu0 0
  %596 = vmatpush.bf16.msra.mxu0 0
  %597 = vmatpush.bf16.msra.mxu0 0
  %598 = vmatpush.bf16.msra.mxu0 0
  %599 = vmatpush.bf16.msra.mxu0 0
  %600 = vmatpush.bf16.msra.mxu0 %v163
  %601 = vmatpush.bf16.msra.mxu0 %v162
  %602 = vmatmul.bf16.gmra.mxu0 %v592
  %v603 = vpop.f32.mrf.mxu0
  %v604 = vadd.f32 %v153, %v603
  %v605 = vpop.f32.mrf.mxu0
  %606 = vdwg.mxu0
  %v607 = vld [vmem:[#allocation2 + $0x18] sm:$0xff]
  %608 = vmatpush.bf16.msra.mxu0 0
  %609 = vmatpush.bf16.msra.mxu0 0
  %610 = vmatpush.bf16.msra.mxu0 0
  %611 = vmatpush.bf16.msra.mxu0 0
  %612 = vmatpush.bf16.msra.mxu0 0
  %613 = vmatpush.bf16.msra.mxu0 0
  %614 = vmatpush.bf16.msra.mxu0 %v192
  %615 = vmatpush.bf16.msra.mxu0 %v191
  %616 = vmatmul.bf16.gmra.mxu0 %v534
  %v617 = vpop.f32.mrf.mxu0
  %v618 = vadd.f32 0.0, %v617
  %v619 = vpop.f32.mrf.mxu0
  %620 = vdwg.mxu0
  %v621 = vadd.f32 %v607, %v618
  %v622 = vxor.u32 %v621, 2147483648
  %v623 = vmul.f32 %v622, 1.442695
  %v624 = vpow.pop %v623
  %v625 = vadd.f32 %v624, 1.0
  %v626 = vrcp.pop %v625
  %v627 = vmul.f32 %v625, %v626
  %v628 = vsub.f32 1.0, %v627
  %v629 = vmul.f32 %v626, %v628
  %v630 = vadd.f32 %v626, %v629
  %vm631 = vweird.f32 %v625
  %vm632 = vweird.f32 %v626
  %vm633 = vmor %vm631, %vm632
  %v634 = vsel %vm633, %v626, %v630
  %v635 = vand.u32 2147483647, %v625
  %vm636 = vcmp.eq.f32.partialorder %v635, 8.507059e+37
  %v637 = vand.u32 %v625, 2147483648
  %v638 = vor.u32 1.1754944e-38, %v637
  %v639 = vsel %vm636, %v638, %v634
  %v640 = vmul.f32 1.0, %v639
  %v641 = vtanh.pop %v621
  %v642 = vmul.f32 %v640, %v522
  %644 = vrot.lane.b32.xlu0 %v641, 64
  %v645 = vpop.permute.xlu0 %644
  %v647 = vmul.f32 %v640, %v645
  %649 = vrot.lane.b32.xlu0 %v647, 32
  %v650 = vpop.permute.xlu0 %649
  %v652 = vadd.f32 %v642, %v650
  %v653 = vtanh.pop %v652
  %655 = vrot.lane.b32.xlu0 %v653, 64
  %v656 = vpop.permute.xlu0 %655
  %v658 = vmul.f32 %v640, %v656
  %v659 = vpack.c.bf16 %v658, %v658
  %661 = vrot.lane.b32.xlu0 %v659, 32
  %v662 = vpop.permute.xlu0 %661
  %v664 = vsel %vm95, %v662, 0
  %666 = vmatpush.bf16.msra.mxu0 0
  %667 = vmatpush.bf16.msra.mxu0 0
  %668 = vmatpush.bf16.msra.mxu0 0
  %669 = vmatpush.bf16.msra.mxu0 0
  %670 = vmatpush.bf16.msra.mxu0 0
  %671 = vmatpush.bf16.msra.mxu0 0
  %672 = vmatpush.bf16.msra.mxu0 %v266
  %673 = vmatpush.bf16.msra.mxu0 %v265
  %674 = vmatmul.bf16.gmra.mxu0 %v664
  %v675 = vpop.f32.mrf.mxu0
  %v676 = vadd.f32 0.0, %v675
  %v677 = vpop.f32.mrf.mxu0
  %678 = vdwg.mxu0
  %v679 = vadd.f32 %v604, %v676
  %v680 = vxor.u32 %v679, 2147483648
  %v681 = vmul.f32 %v680, 1.442695
  %v682 = vpow.pop %v681
  %v683 = vadd.f32 %v682, 1.0
  %v684 = vrcp.pop %v683
  %v685 = vmul.f32 %v683, %v684
  %v686 = vsub.f32 1.0, %v685
  %v687 = vmul.f32 %v684, %v686
  %v688 = vadd.f32 %v684, %v687
  %vm689 = vweird.f32 %v683
  %vm690 = vweird.f32 %v684
  %vm691 = vmor %vm689, %vm690
  %v692 = vsel %vm691, %v684, %v688
  %v693 = vand.u32 2147483647, %v683
  %vm694 = vcmp.eq.f32.partialorder %v693, 8.507059e+37
  %v695 = vand.u32 %v683, 2147483648
  %v696 = vor.u32 1.1754944e-38, %v695
  %v697 = vsel %vm694, %v696, %v692
  %v698 = vmul.f32 1.0, %v697
  %v699 = vtanh.pop %v679
  %v700 = vmul.f32 %v698, %v580
  %702 = vrot.lane.b32.xlu0 %v699, 64
  %v703 = vpop.permute.xlu0 %702
  %v705 = vmul.f32 %v698, %v703
  %707 = vrot.lane.b32.xlu0 %v705, 32
  %v708 = vpop.permute.xlu0 %707
  %v710 = vadd.f32 %v700, %v708
  %v711 = vtanh.pop %v710
  %713 = vrot.lane.b32.xlu0 %v711, 64
  %v714 = vpop.permute.xlu0 %713
  %v716 = vmul.f32 %v698, %v714
  %v717 = vpack.c.bf16 %v716, %v716
  %719 = vrot.lane.b32.xlu0 %v717, 32
  %v720 = vpop.permute.xlu0 %719
  %v722 = vsel %vm95, %v720, 0
  %724 = vmatpush.bf16.msra.mxu0 0
  %725 = vmatpush.bf16.msra.mxu0 0
  %726 = vmatpush.bf16.msra.mxu0 0
  %727 = vmatpush.bf16.msra.mxu0 0
  %728 = vmatpush.bf16.msra.mxu0 0
  %729 = vmatpush.bf16.msra.mxu0 0
  %730 = vmatpush.bf16.msra.mxu0 %v163
  %731 = vmatpush.bf16.msra.mxu0 %v162
  %732 = vmatmul.bf16.gmra.mxu0 %v722
  %v733 = vpop.f32.mrf.mxu0
  %v734 = vadd.f32 %v153, %v733
  %v735 = vpop.f32.mrf.mxu0
  %736 = vdwg.mxu0
  %v737 = vld [vmem:[#allocation2 + $0x20] sm:$0xff]
  %738 = vmatpush.bf16.msra.mxu0 0
  %739 = vmatpush.bf16.msra.mxu0 0
  %740 = vmatpush.bf16.msra.mxu0 0
  %741 = vmatpush.bf16.msra.mxu0 0
  %742 = vmatpush.bf16.msra.mxu0 0
  %743 = vmatpush.bf16.msra.mxu0 0
  %744 = vmatpush.bf16.msra.mxu0 %v192
  %745 = vmatpush.bf16.msra.mxu0 %v191
  %746 = vmatmul.bf16.gmra.mxu0 %v664
  %v747 = vpop.f32.mrf.mxu0
  %v748 = vadd.f32 0.0, %v747
  %v749 = vpop.f32.mrf.mxu0
  %750 = vdwg.mxu0
  %v751 = vadd.f32 %v737, %v748
  %v752 = vxor.u32 %v751, 2147483648
  %v753 = vmul.f32 %v752, 1.442695
  %v754 = vpow.pop %v753
  %v755 = vadd.f32 %v754, 1.0
  %v756 = vrcp.pop %v755
  %v757 = vmul.f32 %v755, %v756
  %v758 = vsub.f32 1.0, %v757
  %v759 = vmul.f32 %v756, %v758
  %v760 = vadd.f32 %v756, %v759
  %vm761 = vweird.f32 %v755
  %vm762 = vweird.f32 %v756
  %vm763 = vmor %vm761, %vm762
  %v764 = vsel %vm763, %v756, %v760
  %v765 = vand.u32 2147483647, %v755
  %vm766 = vcmp.eq.f32.partialorder %v765, 8.507059e+37
  %v767 = vand.u32 %v755, 2147483648
  %v768 = vor.u32 1.1754944e-38, %v767
  %v769 = vsel %vm766, %v768, %v764
  %v770 = vmul.f32 1.0, %v769
  %v771 = vtanh.pop %v751
  %v772 = vmul.f32 %v770, %v652
  %774 = vrot.lane.b32.xlu0 %v771, 64
  %v775 = vpop.permute.xlu0 %774
  %v777 = vmul.f32 %v770, %v775
  %779 = vrot.lane.b32.xlu0 %v777, 32
  %v780 = vpop.permute.xlu0 %779
  %v782 = vadd.f32 %v772, %v780
  %v783 = vtanh.pop %v782
  %785 = vrot.lane.b32.xlu0 %v783, 64
  %v786 = vpop.permute.xlu0 %785
  %v788 = vmul.f32 %v770, %v786
  %v789 = vpack.c.bf16 %v788, %v788
  %791 = vrot.lane.b32.xlu0 %v789, 32
  %v792 = vpop.permute.xlu0 %791
  %v794 = vsel %vm95, %v792, 0
  %796 = vmatpush.bf16.msra.mxu0 0
  %797 = vmatpush.bf16.msra.mxu0 0
  %798 = vmatpush.bf16.msra.mxu0 0
  %799 = vmatpush.bf16.msra.mxu0 0
  %800 = vmatpush.bf16.msra.mxu0 0
  %801 = vmatpush.bf16.msra.mxu0 0
  %802 = vmatpush.bf16.msra.mxu0 %v266
  %803 = vmatpush.bf16.msra.mxu0 %v265
  %804 = vmatmul.bf16.gmra.mxu0 %v794
  %v805 = vpop.f32.mrf.mxu0
  %v806 = vadd.f32 0.0, %v805
  %v807 = vpop.f32.mrf.mxu0
  %808 = vdwg.mxu0
  %v809 = vadd.f32 %v734, %v806
  %v810 = vxor.u32 %v809, 2147483648
  %v811 = vmul.f32 %v810, 1.442695
  %v812 = vpow.pop %v811
  %v813 = vadd.f32 %v812, 1.0
  %v814 = vrcp.pop %v813
  %v815 = vmul.f32 %v813, %v814
  %v816 = vsub.f32 1.0, %v815
  %v817 = vmul.f32 %v814, %v816
  %v818 = vadd.f32 %v814, %v817
  %vm819 = vweird.f32 %v813
  %vm820 = vweird.f32 %v814
  %vm821 = vmor %vm819, %vm820
  %v822 = vsel %vm821, %v814, %v818
  %v823 = vand.u32 2147483647, %v813
  %vm824 = vcmp.eq.f32.partialorder %v823, 8.507059e+37
  %v825 = vand.u32 %v813, 2147483648
  %v826 = vor.u32 1.1754944e-38, %v825
  %v827 = vsel %vm824, %v826, %v822
  %v828 = vmul.f32 1.0, %v827
  %v829 = vtanh.pop %v809
  %v830 = vmul.f32 %v828, %v710
  %832 = vrot.lane.b32.xlu0 %v829, 64
  %v833 = vpop.permute.xlu0 %832
  %v835 = vmul.f32 %v828, %v833
  %837 = vrot.lane.b32.xlu0 %v835, 32
  %v838 = vpop.permute.xlu0 %837
  %v840 = vadd.f32 %v830, %v838
  %v841 = vtanh.pop %v840
  %843 = vrot.lane.b32.xlu0 %v841, 64
  %v844 = vpop.permute.xlu0 %843
  %v846 = vmul.f32 %v828, %v844
  %v847 = vpack.c.bf16 %v846, %v846
  %849 = vrot.lane.b32.xlu0 %v847, 32
  %v850 = vpop.permute.xlu0 %849
  %v852 = vsel %vm95, %v850, 0
  %854 = vmatpush.bf16.msra.mxu0 0
  %855 = vmatpush.bf16.msra.mxu0 0
  %856 = vmatpush.bf16.msra.mxu0 0
  %857 = vmatpush.bf16.msra.mxu0 0
  %858 = vmatpush.bf16.msra.mxu0 0
  %859 = vmatpush.bf16.msra.mxu0 0
  %860 = vmatpush.bf16.msra.mxu0 %v163
  %861 = vmatpush.bf16.msra.mxu0 %v162
  %862 = vmatmul.bf16.gmra.mxu0 %v852
  %v863 = vpop.f32.mrf.mxu0
  %v864 = vadd.f32 %v153, %v863
  %v865 = vpop.f32.mrf.mxu0
  %866 = vdwg.mxu0
  %v867 = vld [vmem:[#allocation2 + $0x28] sm:$0xff]
  %868 = vmatpush.bf16.msra.mxu0 0
  %869 = vmatpush.bf16.msra.mxu0 0
  %870 = vmatpush.bf16.msra.mxu0 0
  %871 = vmatpush.bf16.msra.mxu0 0
  %872 = vmatpush.bf16.msra.mxu0 0
  %873 = vmatpush.bf16.msra.mxu0 0
  %874 = vmatpush.bf16.msra.mxu0 %v192
  %875 = vmatpush.bf16.msra.mxu0 %v191
  %876 = vmatmul.bf16.gmra.mxu0 %v794
  %v877 = vpop.f32.mrf.mxu0
  %v878 = vadd.f32 0.0, %v877
  %v879 = vpop.f32.mrf.mxu0
  %880 = vdwg.mxu0
  %v881 = vadd.f32 %v867, %v878
  %v882 = vxor.u32 %v881, 2147483648
  %v883 = vmul.f32 %v882, 1.442695
  %v884 = vpow.pop %v883
  %v885 = vadd.f32 %v884, 1.0
  %v886 = vrcp.pop %v885
  %v887 = vmul.f32 %v885, %v886
  %v888 = vsub.f32 1.0, %v887
  %v889 = vmul.f32 %v886, %v888
  %v890 = vadd.f32 %v886, %v889
  %vm891 = vweird.f32 %v885
  %vm892 = vweird.f32 %v886
  %vm893 = vmor %vm891, %vm892
  %v894 = vsel %vm893, %v886, %v890
  %v895 = vand.u32 2147483647, %v885
  %vm896 = vcmp.eq.f32.partialorder %v895, 8.507059e+37
  %v897 = vand.u32 %v885, 2147483648
  %v898 = vor.u32 1.1754944e-38, %v897
  %v899 = vsel %vm896, %v898, %v894
  %v900 = vmul.f32 1.0, %v899
  %v901 = vtanh.pop %v881
  %v902 = vmul.f32 %v900, %v782
  %904 = vrot.lane.b32.xlu0 %v901, 64
  %v905 = vpop.permute.xlu0 %904
  %v907 = vmul.f32 %v900, %v905
  %909 = vrot.lane.b32.xlu0 %v907, 32
  %v910 = vpop.permute.xlu0 %909
  %v912 = vadd.f32 %v902, %v910
  %v913 = vtanh.pop %v912
  %915 = vrot.lane.b32.xlu0 %v913, 64
  %v916 = vpop.permute.xlu0 %915
  %v918 = vmul.f32 %v900, %v916
  %v919 = vpack.c.bf16 %v918, %v918
  %921 = vrot.lane.b32.xlu0 %v919, 32
  %v922 = vpop.permute.xlu0 %921
  %v924 = vsel %vm95, %v922, 0
  %926 = vmatpush.bf16.msra.mxu0 0
  %927 = vmatpush.bf16.msra.mxu0 0
  %928 = vmatpush.bf16.msra.mxu0 0
  %929 = vmatpush.bf16.msra.mxu0 0
  %930 = vmatpush.bf16.msra.mxu0 0
  %931 = vmatpush.bf16.msra.mxu0 0
  %932 = vmatpush.bf16.msra.mxu0 %v266
  %933 = vmatpush.bf16.msra.mxu0 %v265
  %934 = vmatmul.bf16.gmra.mxu0 %v924
  %v935 = vpop.f32.mrf.mxu0
  %v936 = vadd.f32 0.0, %v935
  %v937 = vpop.f32.mrf.mxu0
  %938 = vdwg.mxu0
  %v939 = vadd.f32 %v864, %v936
  %v940 = vxor.u32 %v939, 2147483648
  %v941 = vmul.f32 %v940, 1.442695
  %v942 = vpow.pop %v941
  %v943 = vadd.f32 %v942, 1.0
  %v944 = vrcp.pop %v943
  %v945 = vmul.f32 %v943, %v944
  %v946 = vsub.f32 1.0, %v945
  %v947 = vmul.f32 %v944, %v946
  %v948 = vadd.f32 %v944, %v947
  %vm949 = vweird.f32 %v943
  %vm950 = vweird.f32 %v944
  %vm951 = vmor %vm949, %vm950
  %v952 = vsel %vm951, %v944, %v948
  %v953 = vand.u32 2147483647, %v943
  %vm954 = vcmp.eq.f32.partialorder %v953, 8.507059e+37
  %v955 = vand.u32 %v943, 2147483648
  %v956 = vor.u32 1.1754944e-38, %v955
  %v957 = vsel %vm954, %v956, %v952
  %v958 = vmul.f32 1.0, %v957
  %v959 = vtanh.pop %v939
  %v960 = vmul.f32 %v958, %v840
  %962 = vrot.lane.b32.xlu0 %v959, 64
  %v963 = vpop.permute.xlu0 %962
  %v965 = vmul.f32 %v958, %v963
  %967 = vrot.lane.b32.xlu0 %v965, 32
  %v968 = vpop.permute.xlu0 %967
  %v970 = vadd.f32 %v960, %v968
  %v971 = vtanh.pop %v970
  %973 = vrot.lane.b32.xlu0 %v971, 64
  %v974 = vpop.permute.xlu0 %973
  %v976 = vmul.f32 %v958, %v974
  %v977 = vpack.c.bf16 %v976, %v976
  %979 = vrot.lane.b32.xlu0 %v977, 32
  %v980 = vpop.permute.xlu0 %979
  %v982 = vsel %vm95, %v980, 0
  %984 = vmatpush.bf16.msra.mxu0 0
  %985 = vmatpush.bf16.msra.mxu0 0
  %986 = vmatpush.bf16.msra.mxu0 0
  %987 = vmatpush.bf16.msra.mxu0 0
  %988 = vmatpush.bf16.msra.mxu0 0
  %989 = vmatpush.bf16.msra.mxu0 0
  %990 = vmatpush.bf16.msra.mxu0 %v163
  %991 = vmatpush.bf16.msra.mxu0 %v162
  %992 = vmatmul.bf16.gmra.mxu0 %v982
  %v993 = vpop.f32.mrf.mxu0
  %v994 = vadd.f32 %v153, %v993
  %v995 = vpop.f32.mrf.mxu0
  %996 = vdwg.mxu0
  %v997 = vld [vmem:[#allocation2 + $0x30] sm:$0xff]
  %998 = vmatpush.bf16.msra.mxu0 0
  %999 = vmatpush.bf16.msra.mxu0 0
  %1000 = vmatpush.bf16.msra.mxu0 0
  %1001 = vmatpush.bf16.msra.mxu0 0
  %1002 = vmatpush.bf16.msra.mxu0 0
  %1003 = vmatpush.bf16.msra.mxu0 0
  %1004 = vmatpush.bf16.msra.mxu0 %v192
  %1005 = vmatpush.bf16.msra.mxu0 %v191
  %1006 = vmatmul.bf16.gmra.mxu0 %v924
  %v1007 = vpop.f32.mrf.mxu0
  %v1008 = vadd.f32 0.0, %v1007
  %v1009 = vpop.f32.mrf.mxu0
  %1010 = vdwg.mxu0
  %v1011 = vadd.f32 %v997, %v1008
  %v1012 = vxor.u32 %v1011, 2147483648
  %v1013 = vmul.f32 %v1012, 1.442695
  %v1014 = vpow.pop %v1013
  %v1015 = vadd.f32 %v1014, 1.0
  %v1016 = vrcp.pop %v1015
  %v1017 = vmul.f32 %v1015, %v1016
  %v1018 = vsub.f32 1.0, %v1017
  %v1019 = vmul.f32 %v1016, %v1018
  %v1020 = vadd.f32 %v1016, %v1019
  %vm1021 = vweird.f32 %v1015
  %vm1022 = vweird.f32 %v1016
  %vm1023 = vmor %vm1021, %vm1022
  %v1024 = vsel %vm1023, %v1016, %v1020
  %v1025 = vand.u32 2147483647, %v1015
  %vm1026 = vcmp.eq.f32.partialorder %v1025, 8.507059e+37
  %v1027 = vand.u32 %v1015, 2147483648
  %v1028 = vor.u32 1.1754944e-38, %v1027
  %v1029 = vsel %vm1026, %v1028, %v1024
  %v1030 = vmul.f32 1.0, %v1029
  %v1031 = vtanh.pop %v1011
  %v1032 = vmul.f32 %v1030, %v912
  %1034 = vrot.lane.b32.xlu0 %v1031, 64
  %v1035 = vpop.permute.xlu0 %1034
  %v1037 = vmul.f32 %v1030, %v1035
  %1039 = vrot.lane.b32.xlu0 %v1037, 32
  %v1040 = vpop.permute.xlu0 %1039
  %v1042 = vadd.f32 %v1032, %v1040
  %v1043 = vtanh.pop %v1042
  %1045 = vrot.lane.b32.xlu0 %v1043, 64
  %v1046 = vpop.permute.xlu0 %1045
  %v1048 = vmul.f32 %v1030, %v1046
  %v1049 = vpack.c.bf16 %v1048, %v1048
  %1051 = vrot.lane.b32.xlu0 %v1049, 32
  %v1052 = vpop.permute.xlu0 %1051
  %v1054 = vsel %vm95, %v1052, 0
  %1056 = vmatpush.bf16.msra.mxu0 0
  %1057 = vmatpush.bf16.msra.mxu0 0
  %1058 = vmatpush.bf16.msra.mxu0 0
  %1059 = vmatpush.bf16.msra.mxu0 0
  %1060 = vmatpush.bf16.msra.mxu0 0
  %1061 = vmatpush.bf16.msra.mxu0 0
  %1062 = vmatpush.bf16.msra.mxu0 %v266
  %1063 = vmatpush.bf16.msra.mxu0 %v265
  %1064 = vmatmul.bf16.gmra.mxu0 %v1054
  %v1065 = vpop.f32.mrf.mxu0
  %v1066 = vadd.f32 0.0, %v1065
  %v1067 = vpop.f32.mrf.mxu0
  %1068 = vdwg.mxu0
  %v1069 = vadd.f32 %v994, %v1066
  %v1070 = vxor.u32 %v1069, 2147483648
  %v1071 = vmul.f32 %v1070, 1.442695
  %v1072 = vpow.pop %v1071
  %v1073 = vadd.f32 %v1072, 1.0
  %v1074 = vrcp.pop %v1073
  %v1075 = vmul.f32 %v1073, %v1074
  %v1076 = vsub.f32 1.0, %v1075
  %v1077 = vmul.f32 %v1074, %v1076
  %v1078 = vadd.f32 %v1074, %v1077
  %vm1079 = vweird.f32 %v1073
  %vm1080 = vweird.f32 %v1074
  %vm1081 = vmor %vm1079, %vm1080
  %v1082 = vsel %vm1081, %v1074, %v1078
  %v1083 = vand.u32 2147483647, %v1073
  %vm1084 = vcmp.eq.f32.partialorder %v1083, 8.507059e+37
  %v1085 = vand.u32 %v1073, 2147483648
  %v1086 = vor.u32 1.1754944e-38, %v1085
  %v1087 = vsel %vm1084, %v1086, %v1082
  %v1088 = vmul.f32 1.0, %v1087
  %v1089 = vtanh.pop %v1069
  %v1090 = vmul.f32 %v1088, %v970
  %1092 = vrot.lane.b32.xlu0 %v1089, 64
  %v1093 = vpop.permute.xlu0 %1092
  %v1095 = vmul.f32 %v1088, %v1093
  %1097 = vrot.lane.b32.xlu0 %v1095, 32
  %v1098 = vpop.permute.xlu0 %1097
  %v1100 = vadd.f32 %v1090, %v1098
  %v1101 = vtanh.pop %v1100
  %1103 = vrot.lane.b32.xlu0 %v1101, 64
  %v1104 = vpop.permute.xlu0 %1103
  %v1106 = vmul.f32 %v1088, %v1104
  %v1107 = vpack.c.bf16 %v1106, %v1106
  %1109 = vrot.lane.b32.xlu0 %v1107, 32
  %v1110 = vpop.permute.xlu0 %1109
  %v1112 = vsel %vm95, %v1110, 0
  %1114 = vmatpush.bf16.msra.mxu0 0
  %1115 = vmatpush.bf16.msra.mxu0 0
  %1116 = vmatpush.bf16.msra.mxu0 0
  %1117 = vmatpush.bf16.msra.mxu0 0
  %1118 = vmatpush.bf16.msra.mxu0 0
  %1119 = vmatpush.bf16.msra.mxu0 0
  %1120 = vmatpush.bf16.msra.mxu0 %v163
  %1121 = vmatpush.bf16.msra.mxu0 %v162
  %1122 = vmatmul.bf16.gmra.mxu0 %v1112
  %v1123 = vpop.f32.mrf.mxu0
  %v1124 = vadd.f32 %v153, %v1123
  %v1125 = vpop.f32.mrf.mxu0
  %1126 = vdwg.mxu0
  %v1127 = vld [vmem:[#allocation2 + $0x38] sm:$0xff]
  %1128 = vmatpush.bf16.msra.mxu0 0
  %1129 = vmatpush.bf16.msra.mxu0 0
  %1130 = vmatpush.bf16.msra.mxu0 0
  %1131 = vmatpush.bf16.msra.mxu0 0
  %1132 = vmatpush.bf16.msra.mxu0 0
  %1133 = vmatpush.bf16.msra.mxu0 0
  %1134 = vmatpush.bf16.msra.mxu0 %v192
  %1135 = vmatpush.bf16.msra.mxu0 %v191
  %1136 = vmatmul.bf16.gmra.mxu0 %v1054
  %v1137 = vpop.f32.mrf.mxu0
  %v1138 = vadd.f32 0.0, %v1137
  %v1139 = vpop.f32.mrf.mxu0
  %1140 = vdwg.mxu0
  %v1141 = vadd.f32 %v1127, %v1138
  %v1142 = vxor.u32 %v1141, 2147483648
  %v1143 = vmul.f32 %v1142, 1.442695
  %v1144 = vpow.pop %v1143
  %v1145 = vadd.f32 %v1144, 1.0
  %v1146 = vrcp.pop %v1145
  %v1147 = vmul.f32 %v1145, %v1146
  %v1148 = vsub.f32 1.0, %v1147
  %v1149 = vmul.f32 %v1146, %v1148
  %v1150 = vadd.f32 %v1146, %v1149
  %vm1151 = vweird.f32 %v1145
  %vm1152 = vweird.f32 %v1146
  %vm1153 = vmor %vm1151, %vm1152
  %v1154 = vsel %vm1153, %v1146, %v1150
  %v1155 = vand.u32 2147483647, %v1145
  %vm1156 = vcmp.eq.f32.partialorder %v1155, 8.507059e+37
  %v1157 = vand.u32 %v1145, 2147483648
  %v1158 = vor.u32 1.1754944e-38, %v1157
  %v1159 = vsel %vm1156, %v1158, %v1154
  %v1160 = vmul.f32 1.0, %v1159
  %v1161 = vtanh.pop %v1141
  %v1162 = vmul.f32 %v1160, %v1042
  %1164 = vrot.lane.b32.xlu0 %v1161, 64
  %v1165 = vpop.permute.xlu0 %1164
  %v1167 = vmul.f32 %v1160, %v1165
  %1169 = vrot.lane.b32.xlu0 %v1167, 32
  %v1170 = vpop.permute.xlu0 %1169
  %v1172 = vadd.f32 %v1162, %v1170
  %v1173 = vtanh.pop %v1172
  %1175 = vrot.lane.b32.xlu0 %v1173, 64
  %v1176 = vpop.permute.xlu0 %1175
  %v1178 = vmul.f32 %v1160, %v1176
  %v1179 = vpack.c.bf16 %v1178, %v1178
  %1181 = vrot.lane.b32.xlu0 %v1179, 32
  %v1182 = vpop.permute.xlu0 %1181
  %v1184 = vsel %vm95, %v1182, 0
  %1186 = vmatpush.bf16.msra.mxu0 0
  %1187 = vmatpush.bf16.msra.mxu0 0
  %1188 = vmatpush.bf16.msra.mxu0 0
  %1189 = vmatpush.bf16.msra.mxu0 0
  %1190 = vmatpush.bf16.msra.mxu0 0
  %1191 = vmatpush.bf16.msra.mxu0 0
  %1192 = vmatpush.bf16.msra.mxu0 %v266
  %1193 = vmatpush.bf16.msra.mxu0 %v265
  %1194 = vmatmul.bf16.gmra.mxu0 %v1184
  %v1195 = vpop.f32.mrf.mxu0
  %v1196 = vadd.f32 0.0, %v1195
  %v1197 = vpop.f32.mrf.mxu0
  %1198 = vdwg.mxu0
  %v1199 = vadd.f32 %v1124, %v1196
  %v1200 = vxor.u32 %v1199, 2147483648
  %v1201 = vmul.f32 %v1200, 1.442695
  %v1202 = vpow.pop %v1201
  %v1203 = vadd.f32 %v1202, 1.0
  %v1204 = vrcp.pop %v1203
  %v1205 = vmul.f32 %v1203, %v1204
  %v1206 = vsub.f32 1.0, %v1205
  %v1207 = vmul.f32 %v1204, %v1206
  %v1208 = vadd.f32 %v1204, %v1207
  %vm1209 = vweird.f32 %v1203
  %vm1210 = vweird.f32 %v1204
  %vm1211 = vmor %vm1209, %vm1210
  %v1212 = vsel %vm1211, %v1204, %v1208
  %v1213 = vand.u32 2147483647, %v1203
  %vm1214 = vcmp.eq.f32.partialorder %v1213, 8.507059e+37
  %v1215 = vand.u32 %v1203, 2147483648
  %v1216 = vor.u32 1.1754944e-38, %v1215
  %v1217 = vsel %vm1214, %v1216, %v1212
  %v1218 = vmul.f32 1.0, %v1217
  %v1219 = vtanh.pop %v1199
  %v1220 = vmul.f32 %v1218, %v1100
  %1222 = vrot.lane.b32.xlu0 %v1219, 64
  %v1223 = vpop.permute.xlu0 %1222
  %v1225 = vmul.f32 %v1218, %v1223
  %1227 = vrot.lane.b32.xlu0 %v1225, 32
  %v1228 = vpop.permute.xlu0 %1227
  %v1230 = vadd.f32 %v1220, %v1228
  %v1231 = vtanh.pop %v1230
  %1233 = vrot.lane.b32.xlu0 %v1231, 64
  %v1234 = vpop.permute.xlu0 %1233
  %v1236 = vmul.f32 %v1218, %v1234
  %v1237 = vld [vmem:[%s6] sm:$0xff]
  %v1238 = vld [vmem:[%s6 + $0x8] sm:$0xff]
  %v1239 = vld [vmem:[%s6 + $0x10] sm:$0xff]
  %v1240 = vld [vmem:[%s6 + $0x18] sm:$0xff]
  %v1241 = vld [vmem:[%s7] sm:$0x1]
  %v1243 = vperm.slane %v1241, 0
  %1246 = vrot.lane.b32.xlu0 %v1236, 32
  %v1247 = vpop.permute.xlu0 %1246
  %v1248 = vsel %vm95, %v1247, 0
  %1250 = vmatpush.msra.mxu0 0.0
  %1251 = vmatpush.msra.mxu0 0.0
  %1252 = vmatpush.msra.mxu0 0.0
  %1253 = vmatpush.msra.mxu0 0.0
  %1254 = vmatpush.msra.mxu0 0.0
  %1255 = vmatpush.msra.mxu0 0.0
  %1256 = vmatpush.msra.mxu0 0.0
  %1257 = vmatpush.msra.mxu0 0.0
  %1258 = vmatpush.msra.mxu0 0.0
  %1259 = vmatpush.msra.mxu0 0.0
  %1260 = vmatpush.msra.mxu0 0.0
  %1261 = vmatpush.msra.mxu0 0.0
  %1262 = vmatpush.msra.mxu0 %v1240
  %1263 = vmatpush.msra.mxu0 %v1239
  %1264 = vmatpush.msra.mxu0 %v1238
  %1265 = vmatpush.msra.mxu0 %v1237
  %1266 = vmatmul.f32.gmra.mxu0 %v1248
  %v1267 = vpop.f32.mrf.mxu0
  %v1268 = vadd.f32 %v1243, %v1267
  %1269 = vdwg.mxu0
  %v1270 = vtanh.pop %v1268
  %v1271 = vld [vmem:[%s8] sm:$0xff]
  %v1272 = vld [vmem:[%s8 + $0x8] sm:$0x3]
  %v1273 = vld [vmem:[%s9] sm:$0x1]
  %v1275 = vperm.slane %v1273, 0
  %vm1277 = vcmask 80896
  %v1279 = vsel %vm1277, %v1270, 0
  %vm1281 = vcmask 1041408
  %v1283 = vsel %vm1281, %v1272, 0
  %1285 = vmatpush.msra.mxu0 0.0
  %1286 = vmatpush.msra.mxu0 0.0
  %1287 = vmatpush.msra.mxu0 0.0
  %1288 = vmatpush.msra.mxu0 0.0
  %1289 = vmatpush.msra.mxu0 0.0
  %1290 = vmatpush.msra.mxu0 0.0
  %1291 = vmatpush.msra.mxu0 0.0
  %1292 = vmatpush.msra.mxu0 0.0
  %1293 = vmatpush.msra.mxu0 0.0
  %1294 = vmatpush.msra.mxu0 0.0
  %1295 = vmatpush.msra.mxu0 0.0
  %1296 = vmatpush.msra.mxu0 0.0
  %1297 = vmatpush.msra.mxu0 0.0
  %1298 = vmatpush.msra.mxu0 0.0
  %1299 = vmatpush.msra.mxu0 %v1283
  %1300 = vmatpush.msra.mxu0 %v1271
  %1301 = vmatmul.f32.gmra.mxu0 %v1279
  %v1302 = vpop.f32.mrf.mxu0
  %v1303 = vadd.f32 %v1275, %v1302
  %1304 = vdwg.mxu0
  %vm1305 = vcmask 31744
  %1306 = vst.msk [vmem:[%s10] sm:$0xff] %vm1305, %v1303
  // Predicated region
  $region42: #{tpu_custom_call.1} parent=0 // pred_check
    _
  $region43: #{tpu_custom_call.1} parent=0 // pred_check_branch
    %1308 = sbr.rel (0) target = $region45
  $region44: #{tpu_custom_call.1} parent=0 // pred_region
    _
  $region45: #{tpu_custom_call.1} parent=0 // pred_fallthru
    _
  // Predicated region
  $region46: #{tpu_custom_call.1} parent=0 // pred_check
    _
  $region47: #{tpu_custom_call.1} parent=0 // pred_check_branch
    %1310 = sbr.rel (0) target = $region49
  $region48: #{tpu_custom_call.1} parent=0 // pred_region
    _
  $region49: #{tpu_custom_call.1} parent=0 // pred_fallthru
    _

</llo_original>
